<compile_context>
chip_gen: v6e
topology: v6e:2x2x1
jax: 0.10.0
libtpu: 0.0.40
codegen_flags: <defaults>
</compile_context>

<pallas_src>
import functools
import math

import jax
import jax.numpy as jnp
from jax import lax
from jax.experimental import pallas as pl
from jax.experimental.pallas import tpu as pltpu


def _mhda_kernel(lam_ref, x_ref, w_ref, wo_ref, b_ref, bo_ref, o_ref,
                 proj_ref, acc_ref, *, n_heads, tq, tk, scale, out_scale):
    """One batch block of multi-head differential attention.

    Refs:
      lam_ref  : (h,)         f32 SMEM   per-head lambda_full
      x_ref    : (Bt, N, D)              input tokens for this batch block
      w_ref    : (h, D, 5D)              [Wq1|Wq2|Wk1|Wk2|Wv]^T per head
      wo_ref   : (h, D, D)               per-head slice of Wo^T
      b_ref    : (h, 1, 5D)   f32        fused projection biases
      bo_ref   : (1, D)       f32        output-projection bias
      o_ref    : (Bt, N, D)              output block
      proj_ref : (Bt, N, 5D)  VMEM       per-head Q1|Q2|K1|K2|V scratch
      acc_ref  : (Bt, N, D)   f32 VMEM   fused W_o accumulator
    """
    bt, n, d = x_ref.shape
    x2d = x_ref[...].reshape(bt * n, d)
    acc_ref[...] = jnp.zeros_like(acc_ref)

    nq = n // tq
    nk = n // tk

    def head_body(hi, carry):
        lam = lam_ref[hi]                      # scalar, SMEM
        w = w_ref[hi]                          # (D, 5D)
        wo = wo_ref[hi]                        # (D, D)

        # Fused Q1|Q2|K1|K2|V projection: one wide MXU matmul per head.
        proj = jnp.dot(x2d, w, preferred_element_type=jnp.float32) + b_ref[hi]
        proj_ref[...] = proj.reshape(bt, n, 5 * d).astype(proj_ref.dtype)

        def q_body(qi, carry_q):
            q0 = pl.multiple_of(qi * tq, tq)
            q1 = proj_ref[:, pl.ds(q0, tq), 0 * d:1 * d]     # (Bt, tq, D)
            q2 = proj_ref[:, pl.ds(q0, tq), 1 * d:2 * d]

            def kv_body(ki, st):
                m1, l1, a1, m2, l2, a2 = st
                k0 = pl.multiple_of(ki * tk, tk)
                k1 = proj_ref[:, pl.ds(k0, tk), 2 * d:3 * d]  # (Bt, tk, D)
                k2 = proj_ref[:, pl.ds(k0, tk), 3 * d:4 * d]
                vt = proj_ref[:, pl.ds(k0, tk), 4 * d:5 * d]

                s1 = jnp.einsum('bqd,bkd->bqk', q1, k1,
                                preferred_element_type=jnp.float32) * scale
                s2 = jnp.einsum('bqd,bkd->bqk', q2, k2,
                                preferred_element_type=jnp.float32) * scale

                m1n = jnp.maximum(m1, jnp.max(s1, axis=-1, keepdims=True))
                m2n = jnp.maximum(m2, jnp.max(s2, axis=-1, keepdims=True))
                p1 = jnp.exp(s1 - m1n)
                p2 = jnp.exp(s2 - m2n)
                c1 = jnp.exp(m1 - m1n)
                c2 = jnp.exp(m2 - m2n)
                l1 = c1 * l1 + jnp.sum(p1, axis=-1, keepdims=True)
                l2 = c2 * l2 + jnp.sum(p2, axis=-1, keepdims=True)
                a1 = c1 * a1 + jnp.einsum('bqk,bkd->bqd', p1.astype(vt.dtype), vt,
                                          preferred_element_type=jnp.float32)
                a2 = c2 * a2 + jnp.einsum('bqk,bkd->bqd', p2.astype(vt.dtype), vt,
                                          preferred_element_type=jnp.float32)
                return m1n, l1, a1, m2n, l2, a2

            init = (jnp.full((bt, tq, 1), -jnp.inf, jnp.float32),
                    jnp.zeros((bt, tq, 1), jnp.float32),
                    jnp.zeros((bt, tq, d), jnp.float32),
                    jnp.full((bt, tq, 1), -jnp.inf, jnp.float32),
                    jnp.zeros((bt, tq, 1), jnp.float32),
                    jnp.zeros((bt, tq, d), jnp.float32))
            m1, l1, a1, m2, l2, a2 = lax.fori_loop(0, nk, kv_body, init)

            # Per-row reciprocals (EUP) with lambda folded in — no N^2 divides.
            inv1 = pl.reciprocal(l1, approx=True)
            inv2 = lam * pl.reciprocal(l2, approx=True)
            o_head = a1 * inv1 - a2 * inv2                   # (Bt, tq, D) f32

            # Fused output projection: accumulate O_i @ Wo^T[i*D:(i+1)*D, :].
            o2d = o_head.reshape(bt * tq, d).astype(wo.dtype)
            upd = jnp.dot(o2d, wo, preferred_element_type=jnp.float32)
            acc_ref[:, pl.ds(q0, tq), :] += upd.reshape(bt, tq, d)
            return carry_q

        return lax.fori_loop(0, nq, q_body, carry)

    lax.fori_loop(0, n_heads, head_body, 0)

    y = (acc_ref[...] + bo_ref[...]) * out_scale
    o_ref[...] = y.astype(o_ref.dtype)


def _pick_tile(n, target):
    """Largest divisor of n that is <= target (n itself if n <= target)."""
    if n <= target:
        return n
    for t in range(target, 0, -1):
        if n % t == 0:
            return t
    return n


@functools.partial(jax.jit,
                   static_argnames=("lambda_init", "q_tile", "k_tile", "max_rows"))
def multi_head_diff_attention(x, Wq, bq, Wk, bk, Wv, bv, Wo, bo,
                              lambda_q1, lambda_k1, lambda_q2, lambda_k2,
                              *, lambda_init, q_tile=128, k_tile=512,
                              max_rows=2048):
    """PyTorch-layout params:
       x: [B, N, D]; Wq, Wk: [h, 2D, D]; bq, bk: [h, 2D];
       Wv: [h, D, D]; bv: [h, D]; Wo: [D, h*D]; bo: [D]; lambda_*: [h, D]."""
    B, N, D = x.shape
    h = Wq.shape[0]
    cdtype = x.dtype

    # ---- one-time parameter glue: transpose / concat / reparameterize ----
    wq_t = jnp.transpose(Wq, (0, 2, 1))                   # (h, D, 2D) = [q1|q2]
    wk_t = jnp.transpose(Wk, (0, 2, 1))                   # (h, D, 2D) = [k1|k2]
    wv_t = jnp.transpose(Wv, (0, 2, 1))                   # (h, D, D)
    w_all = jnp.concatenate([wq_t, wk_t, wv_t], axis=-1).astype(cdtype)  # (h,D,5D)
    wo_h = jnp.transpose(Wo, (1, 0)).reshape(h, D, D).astype(cdtype)     # Wo^T slices

    b_all = jnp.concatenate([bq, bk, bv], axis=-1).reshape(h, 1, 5 * D)
    b_all = b_all.astype(jnp.float32)                     # [bq1|bq2|bk1|bk2|bv]
    bo2 = bo.reshape(1, D).astype(jnp.float32)

    lam1 = jnp.exp(jnp.sum(lambda_q1 * lambda_k1, axis=-1))
    lam2 = jnp.exp(jnp.sum(lambda_q2 * lambda_k2, axis=-1))
    lam_full = (lam1 - lam2 + lambda_init).astype(jnp.float32)   # (h,)

    scale = 1.0 / math.sqrt(D)
    out_scale = 1.0 - lambda_init

    # ---- generation-safe tiling (fits v7x 64 MiB / v5e 16 MiB scoped) ----
    tq = _pick_tile(N, q_tile)
    tk = _pick_tile(N, k_tile)
    bt = 1
    for c in range(B, 0, -1):
        if B % c == 0 and c * N <= max_rows:
            bt = c
            break

    itemsize = jnp.dtype(cdtype).itemsize
    cost = pl.CostEstimate(
        flops=int(B * h * (12 * N * D * D + 8 * N * N * D)),
        transcendentals=int(B * h * 2 * N * N),
        bytes_accessed=int(itemsize * (2 * B * N * D + h * 6 * D * D)
                           + 4 * (h + 5 * h * D + D)),
    )

    kernel = functools.partial(_mhda_kernel, n_heads=h, tq=tq, tk=tk,
                               scale=scale, out_scale=out_scale)

    out = pl.pallas_call(
        kernel,
        out_shape=jax.ShapeDtypeStruct((B, N, D), cdtype),
        grid_spec=pltpu.PrefetchScalarGridSpec(
            num_scalar_prefetch=0,
            grid=(B // bt,),
            in_specs=[
                pl.BlockSpec(memory_space=pltpu.MemorySpace.SMEM),  # lam_full
                pl.BlockSpec((bt, N, D), lambda b: (b, 0, 0)),      # x
                pl.BlockSpec((h, D, 5 * D), lambda b: (0, 0, 0)),   # fused QKV W
                pl.BlockSpec((h, D, D), lambda b: (0, 0, 0)),       # Wo slices
                pl.BlockSpec((h, 1, 5 * D), lambda b: (0, 0, 0)),   # fused QKV b
                pl.BlockSpec((1, D), lambda b: (0, 0)),             # bo
            ],
            out_specs=pl.BlockSpec((bt, N, D), lambda b: (b, 0, 0)),
            scratch_shapes=[
                pltpu.VMEM((bt, N, 5 * D), cdtype),     # per-head Q1|Q2|K1|K2|V
                pltpu.VMEM((bt, N, D), jnp.float32),    # fused W_o accumulator
            ],
        ),
        compiler_params=pltpu.CompilerParams(
            dimension_semantics=("parallel",),
            vmem_limit_bytes=48 * 1024 * 1024,
        ),
        cost_estimate=cost,
    )(lam_full, x, w_all, wo_h, b_all, bo2)

    return out


def _reference(x, Wq, bq, Wk, bk, Wv, bv, Wo, bo,
               lambda_q1, lambda_k1, lambda_q2, lambda_k2, lambda_init):
    """Pure-JAX reference matching the PyTorch forward."""
    B, N, D = x.shape
    h = Wq.shape[0]
    s = 1.0 / math.sqrt(D)
    hp = lax.Precision.HIGHEST
    outs = []
    for i in range(h):
        Q = jnp.einsum('bnd,ed->bne', x, Wq[i], precision=hp) + bq[i]
        K = jnp.einsum('bnd,ed->bne', x, Wk[i], precision=hp) + bk[i]
        V = jnp.einsum('bnd,ed->bne', x, Wv[i], precision=hp) + bv[i]
        Q1, Q2 = Q[..., :D], Q[..., D:]
        K1, K2 = K[..., :D], K[..., D:]
        A1 = jnp.einsum('bnd,bmd->bnm', Q1, K1, precision=hp) * s
        A2 = jnp.einsum('bnd,bmd->bnm', Q2, K2, precision=hp) * s
        P1 = jax.nn.softmax(A1, axis=-1)
        P2 = jax.nn.softmax(A2, axis=-1)
        lam = (jnp.exp(jnp.sum(lambda_q1[i] * lambda_k1[i]))
               - jnp.exp(jnp.sum(lambda_q2[i] * lambda_k2[i])) + lambda_init)
        outs.append(jnp.einsum('bnm,bmd->bnd', P1 - lam * P2, V, precision=hp))
    Ocat = jnp.concatenate(outs, axis=-1)
    y = jnp.einsum('bnk,dk->bnd', Ocat, Wo, precision=hp) + bo
    return y * (1.0 - lambda_init)


if __name__ == "__main__":
    batch, seq, dim, heads = 2, 64, 64, 2
    lambda_init = 0.8

    key = jax.random.PRNGKey(0)
    keys = jax.random.split(key, 13)

    bnd = 1.0 / math.sqrt(dim)            # PyTorch Linear(dim, *) init bound
    bnd_o = 1.0 / math.sqrt(heads * dim)  # W_o: Linear(h*dim, dim)

    x = jax.random.normal(keys[0], (batch, seq, dim), jnp.float32)
    Wq = jax.random.uniform(keys[1], (heads, 2 * dim, dim), jnp.float32, -bnd, bnd)
    bq = jax.random.uniform(keys[2], (heads, 2 * dim), jnp.float32, -bnd, bnd)
    Wk = jax.random.uniform(keys[3], (heads, 2 * dim, dim), jnp.float32, -bnd, bnd)
    bk = jax.random.uniform(keys[4], (heads, 2 * dim), jnp.float32, -bnd, bnd)
    Wv = jax.random.uniform(keys[5], (heads, dim, dim), jnp.float32, -bnd, bnd)
    bv = jax.random.uniform(keys[6], (heads, dim), jnp.float32, -bnd, bnd)
    Wo = jax.random.uniform(keys[7], (dim, heads * dim), jnp.float32, -bnd_o, bnd_o)
    bo = jax.random.uniform(keys[8], (dim,), jnp.float32, -bnd_o, bnd_o)
    lambda_q1 = 0.1 * jax.random.normal(keys[9], (heads, dim), jnp.float32)
    lambda_k1 = 0.1 * jax.random.normal(keys[10], (heads, dim), jnp.float32)
    lambda_q2 = 0.1 * jax.random.normal(keys[11], (heads, dim), jnp.float32)
    lambda_k2 = 0.1 * jax.random.normal(keys[12], (heads, dim), jnp.float32)

    # Small tiles / row cap so this small test exercises the multi-grid path,
    # the in-kernel head loop, query-tile loop and online-softmax key loop.
    out = multi_head_diff_attention(x, Wq, bq, Wk, bk, Wv, bv, Wo, bo,
                                    lambda_q1, lambda_k1, lambda_q2, lambda_k2,
                                    lambda_init=lambda_init,
                                    q_tile=32, k_tile=32, max_rows=64)
    out = jax.block_until_ready(out)

    ref = _reference(x, Wq, bq, Wk, bk, Wv, bv, Wo, bo,
                     lambda_q1, lambda_k1, lambda_q2, lambda_k2, lambda_init)

    assert out.shape == (batch, seq, dim)
    max_diff = float(jnp.max(jnp.abs(out - ref)))
    assert jnp.allclose(out, ref, atol=5e-3, rtol=5e-3), (
        f"mismatch vs reference, max abs diff = {max_diff}")

    print("KERNEL_OK")
</pallas_src>

<mosaic_0001>
module attributes {stable_mosaic.version = 11 : i64} {
  func.func @_mhda_kernel(%arg0: i32, %arg1: memref<2xf32, #tpu.memory_space<smem>>, %arg2: memref<1x64x64xf32, #tpu.memory_space<vmem>>, %arg3: memref<2x64x320xf32, #tpu.memory_space<vmem>>, %arg4: memref<2x64x64xf32, #tpu.memory_space<vmem>>, %arg5: memref<2x1x320xf32, #tpu.memory_space<vmem>>, %arg6: memref<1x64xf32, #tpu.memory_space<vmem>>, %arg7: memref<1x64x64xf32, #tpu.memory_space<vmem>>, %arg8: memref<1x64x320xf32, #tpu.memory_space<vmem>>, %arg9: memref<1x64x64xf32, #tpu.memory_space<vmem>>) attributes {dimension_semantics = [#tpu.dimension_semantics<parallel>], iteration_bounds = array<i64: 2>, scalar_prefetch = 0 : i64, scratch_operands = 2 : i64, tpu.core_type = #tpu.core_type<tc>, window_params = [{transform_indices = @transform_0, window_bounds = array<i64: 2>}, {transform_indices = @transform_1, window_bounds = array<i64: 1, 64, 64>}, {pipeline_mode = #tpu.pipeline_mode<synchronous>, transform_indices = @transform_2, window_bounds = array<i64: 2, 64, 320>}, {pipeline_mode = #tpu.pipeline_mode<synchronous>, transform_indices = @transform_3, window_bounds = array<i64: 2, 64, 64>}, {pipeline_mode = #tpu.pipeline_mode<synchronous>, transform_indices = @transform_4, window_bounds = array<i64: 2, 1, 320>}, {pipeline_mode = #tpu.pipeline_mode<synchronous>, transform_indices = @transform_5, window_bounds = array<i64: 1, 64>}, {transform_indices = @transform_6, window_bounds = array<i64: 1, 64, 64>}]} {
    %c0 = arith.constant 0 : index
    %c0_0 = arith.constant 0 : index
    %c0_1 = arith.constant 0 : index
    %0 = vector.load %arg2[%c0, %c0_0, %c0_1] : memref<1x64x64xf32, #tpu.memory_space<vmem>>, vector<1x64x64xf32>
    %1 = vector.shape_cast %0 : vector<1x64x64xf32> to vector<64x64xf32>
    %cst = arith.constant 0.000000e+00 : f32
    %2 = vector.broadcast %cst : f32 to vector<1x64x64xf32>
    %c0_2 = arith.constant 0 : index
    %c0_3 = arith.constant 0 : index
    %c0_4 = arith.constant 0 : index
    %3 = vector.load %arg9[%c0_2, %c0_3, %c0_4] : memref<1x64x64xf32, #tpu.memory_space<vmem>>, vector<1x64x64xf32>
    tpu.vector_store %arg9[%c0_2, %c0_3, %c0_4], %2 {strides = array<i32>} : memref<1x64x64xf32, #tpu.memory_space<vmem>>, vector<1x64x64xf32>,
    %c0_i32 = arith.constant 0 : i32
    %c2_i32 = arith.constant 2 : i32
    %4 = arith.addi %c0_i32, %c2_i32 : i32
    %c1_i32 = arith.constant 1 : i32
    scf.for %arg10 = %c0_i32 to %4 step %c1_i32  : i32 {
      %13 = arith.index_cast %arg10 : i32 to index
      %14 = memref.load %arg1[%13] : memref<2xf32, #tpu.memory_space<smem>>
      %15 = arith.index_cast %arg10 : i32 to index
      %c0_15 = arith.constant 0 : index
      %c0_16 = arith.constant 0 : index
      %16 = vector.load %arg3[%15, %c0_15, %c0_16] : memref<2x64x320xf32, #tpu.memory_space<vmem>>, vector<1x64x320xf32>
      %17 = vector.shape_cast %16 : vector<1x64x320xf32> to vector<64x320xf32>
      %18 = arith.index_cast %arg10 : i32 to index
      %c0_17 = arith.constant 0 : index
      %c0_18 = arith.constant 0 : index
      %19 = vector.load %arg4[%18, %c0_17, %c0_18] : memref<2x64x64xf32, #tpu.memory_space<vmem>>, vector<1x64x64xf32>
      %20 = vector.shape_cast %19 : vector<1x64x64xf32> to vector<64x64xf32>
      %cst_19 = arith.constant dense<0.000000e+00> : vector<64x320xf32>
      %21 = tpu.matmul %1, %17, %cst_19 {dimension_numbers = #tpu.dot_dimension_numbers<[1], [0], [0], [1], [0, 0, 1, 1], [], []>} : vector<64x64xf32>, vector<64x320xf32>, vector<64x320xf32> -> vector<64x320xf32>
      %22 = arith.index_cast %arg10 : i32 to index
      %c0_20 = arith.constant 0 : index
      %c0_21 = arith.constant 0 : index
      %23 = vector.load %arg5[%22, %c0_20, %c0_21] : memref<2x1x320xf32, #tpu.memory_space<vmem>>, vector<1x1x320xf32>
      %24 = vector.shape_cast %23 : vector<1x1x320xf32> to vector<1x320xf32>
      %25 = vector.broadcast %24 : vector<1x320xf32> to vector<64x320xf32>
      %26 = arith.addf %21, %25 : vector<64x320xf32>
      %27 = vector.shape_cast %26 : vector<64x320xf32> to vector<1x64x320xf32>
      %c0_22 = arith.constant 0 : index
      %c0_23 = arith.constant 0 : index
      %c0_24 = arith.constant 0 : index
      %28 = vector.load %arg8[%c0_22, %c0_23, %c0_24] : memref<1x64x320xf32, #tpu.memory_space<vmem>>, vector<1x64x320xf32>
      tpu.vector_store %arg8[%c0_22, %c0_23, %c0_24], %27 {strides = array<i32>} : memref<1x64x320xf32, #tpu.memory_space<vmem>>, vector<1x64x320xf32>,
      %c0_i32_25 = arith.constant 0 : i32
      %c2_i32_26 = arith.constant 2 : i32
      %29 = arith.addi %c0_i32_25, %c2_i32_26 : i32
      %c1_i32_27 = arith.constant 1 : i32
      scf.for %arg11 = %c0_i32_25 to %29 step %c1_i32_27  : i32 {
        %c32_i32 = arith.constant 32 : i32
        %30 = arith.muli %arg11, %c32_i32 : i32
        %31 = tpu.assume_multiple %30, 32 : i32
        %c0_29 = arith.constant 0 : index
        %32 = arith.index_cast %31 : i32 to index
        %c0_30 = arith.constant 0 : index
        %33 = vector.load %arg8[%c0_29, %32, %c0_30] : memref<1x64x320xf32, #tpu.memory_space<vmem>>, vector<1x32x64xf32>
        %c0_31 = arith.constant 0 : index
        %34 = arith.index_cast %31 : i32 to index
        %c64 = arith.constant 64 : index
        %35 = vector.load %arg8[%c0_31, %34, %c64] : memref<1x64x320xf32, #tpu.memory_space<vmem>>, vector<1x32x64xf32>
        %cst_32 = arith.constant 0xFF800000 : f32
        %36 = vector.broadcast %cst_32 : f32 to vector<1x32x1xf32>
        %cst_33 = arith.constant 0.000000e+00 : f32
        %37 = vector.broadcast %cst_33 : f32 to vector<1x32x1xf32>
        %cst_34 = arith.constant 0.000000e+00 : f32
        %38 = vector.broadcast %cst_34 : f32 to vector<1x32x64xf32>
        %cst_35 = arith.constant 0xFF800000 : f32
        %39 = vector.broadcast %cst_35 : f32 to vector<1x32x1xf32>
        %cst_36 = arith.constant 0.000000e+00 : f32
        %40 = vector.broadcast %cst_36 : f32 to vector<1x32x1xf32>
        %cst_37 = arith.constant 0.000000e+00 : f32
        %41 = vector.broadcast %cst_37 : f32 to vector<1x32x64xf32>
        %c0_i32_38 = arith.constant 0 : i32
        %c2_i32_39 = arith.constant 2 : i32
        %42 = arith.addi %c0_i32_38, %c2_i32_39 : i32
        %c1_i32_40 = arith.constant 1 : i32
        %43:6 = scf.for %arg12 = %c0_i32_38 to %42 step %c1_i32_40 iter_args(%arg13 = %36, %arg14 = %37, %arg15 = %38, %arg16 = %39, %arg17 = %40, %arg18 = %41) -> (vector<1x32x1xf32>, vector<1x32x1xf32>, vector<1x32x64xf32>, vector<1x32x1xf32>, vector<1x32x1xf32>, vector<1x32x64xf32>)  : i32 {
          %c32_i32_47 = arith.constant 32 : i32
          %61 = arith.muli %arg12, %c32_i32_47 : i32
          %62 = tpu.assume_multiple %61, 32 : i32
          %c0_48 = arith.constant 0 : index
          %63 = arith.index_cast %62 : i32 to index
          %c128 = arith.constant 128 : index
          %64 = vector.load %arg8[%c0_48, %63, %c128] : memref<1x64x320xf32, #tpu.memory_space<vmem>>, vector<1x32x64xf32>
          %c0_49 = arith.constant 0 : index
          %65 = arith.index_cast %62 : i32 to index
          %c192 = arith.constant 192 : index
          %66 = vector.load %arg8[%c0_49, %65, %c192] : memref<1x64x320xf32, #tpu.memory_space<vmem>>, vector<1x32x64xf32>
          %c0_50 = arith.constant 0 : index
          %67 = arith.index_cast %62 : i32 to index
          %c256 = arith.constant 256 : index
          %68 = vector.load %arg8[%c0_50, %67, %c256] : memref<1x64x320xf32, #tpu.memory_space<vmem>>, vector<1x32x64xf32>
          "tpu.trace_start"() <{level = 10 : i32, message = "bqd,bkd->bqk"}> : () -> ()
          %cst_51 = arith.constant dense<0.000000e+00> : vector<1x32x32xf32>
          %69 = tpu.matmul %33, %64, %cst_51 {dimension_numbers = #tpu.dot_dimension_numbers<[2], [2], [1], [1], [0, 0, 0, 1, 1, 1], [0], [0]>} : vector<1x32x64xf32>, vector<1x32x64xf32>, vector<1x32x32xf32> -> vector<1x32x32xf32>
          "tpu.trace_stop"() : () -> ()
          %cst_52 = arith.constant 1.250000e-01 : f32
          %70 = vector.broadcast %cst_52 : f32 to vector<1x32x32xf32>
          %71 = arith.mulf %69, %70 : vector<1x32x32xf32>
          "tpu.trace_start"() <{level = 10 : i32, message = "bqd,bkd->bqk"}> : () -> ()
          %cst_53 = arith.constant dense<0.000000e+00> : vector<1x32x32xf32>
          %72 = tpu.matmul %35, %66, %cst_53 {dimension_numbers = #tpu.dot_dimension_numbers<[2], [2], [1], [1], [0, 0, 0, 1, 1, 1], [0], [0]>} : vector<1x32x64xf32>, vector<1x32x64xf32>, vector<1x32x32xf32> -> vector<1x32x32xf32>
          "tpu.trace_stop"() : () -> ()
          %cst_54 = arith.constant 1.250000e-01 : f32
          %73 = vector.broadcast %cst_54 : f32 to vector<1x32x32xf32>
          %74 = arith.mulf %72, %73 : vector<1x32x32xf32>
          %cst_55 = arith.constant dense<0xFF800000> : vector<1x32xf32>
          %75 = vector.multi_reduction <maximumf>, %71, %cst_55 [2] : vector<1x32x32xf32> to vector<1x32xf32>
          %76 = vector.shape_cast %75 : vector<1x32xf32> to vector<1x32x1xf32>
          %77 = arith.maximumf %arg13, %76 : vector<1x32x1xf32>
          %cst_56 = arith.constant dense<0xFF800000> : vector<1x32xf32>
          %78 = vector.multi_reduction <maximumf>, %74, %cst_56 [2] : vector<1x32x32xf32> to vector<1x32xf32>
          %79 = vector.shape_cast %78 : vector<1x32xf32> to vector<1x32x1xf32>
          %80 = arith.maximumf %arg16, %79 : vector<1x32x1xf32>
          %81 = vector.broadcast %77 : vector<1x32x1xf32> to vector<1x32x32xf32>
          %82 = arith.subf %71, %81 : vector<1x32x32xf32>
          %83 = math.exp %82 : vector<1x32x32xf32>
          %84 = vector.broadcast %80 : vector<1x32x1xf32> to vector<1x32x32xf32>
          %85 = arith.subf %74, %84 : vector<1x32x32xf32>
          %86 = math.exp %85 : vector<1x32x32xf32>
          %87 = arith.subf %arg13, %77 : vector<1x32x1xf32>
          %88 = math.exp %87 : vector<1x32x1xf32>
          %89 = arith.subf %arg16, %80 : vector<1x32x1xf32>
          %90 = math.exp %89 : vector<1x32x1xf32>
          %91 = arith.mulf %88, %arg14 : vector<1x32x1xf32>
          %cst_57 = arith.constant dense<0.000000e+00> : vector<1x32xf32>
          %92 = vector.multi_reduction <add>, %83, %cst_57 [2] : vector<1x32x32xf32> to vector<1x32xf32>
          %93 = vector.shape_cast %92 : vector<1x32xf32> to vector<1x32x1xf32>
          %94 = arith.addf %91, %93 : vector<1x32x1xf32>
          %95 = arith.mulf %90, %arg17 : vector<1x32x1xf32>
          %cst_58 = arith.constant dense<0.000000e+00> : vector<1x32xf32>
          %96 = vector.multi_reduction <add>, %86, %cst_58 [2] : vector<1x32x32xf32> to vector<1x32xf32>
          %97 = vector.shape_cast %96 : vector<1x32xf32> to vector<1x32x1xf32>
          %98 = arith.addf %95, %97 : vector<1x32x1xf32>
          %99 = vector.broadcast %88 : vector<1x32x1xf32> to vector<1x32x64xf32>
          %100 = arith.mulf %99, %arg15 : vector<1x32x64xf32>
          "tpu.trace_start"() <{level = 10 : i32, message = "bqk,bkd->bqd"}> : () -> ()
          %cst_59 = arith.constant dense<0.000000e+00> : vector<1x32x64xf32>
          %101 = tpu.matmul %83, %68, %cst_59 {dimension_numbers = #tpu.dot_dimension_numbers<[2], [1], [1], [2], [0, 0, 0, 1, 1, 2], [0], [0]>} : vector<1x32x32xf32>, vector<1x32x64xf32>, vector<1x32x64xf32> -> vector<1x32x64xf32>
          "tpu.trace_stop"() : () -> ()
          %102 = arith.addf %100, %101 : vector<1x32x64xf32>
          %103 = vector.broadcast %90 : vector<1x32x1xf32> to vector<1x32x64xf32>
          %104 = arith.mulf %103, %arg18 : vector<1x32x64xf32>
          "tpu.trace_start"() <{level = 10 : i32, message = "bqk,bkd->bqd"}> : () -> ()
          %cst_60 = arith.constant dense<0.000000e+00> : vector<1x32x64xf32>
          %105 = tpu.matmul %86, %68, %cst_60 {dimension_numbers = #tpu.dot_dimension_numbers<[2], [1], [1], [2], [0, 0, 0, 1, 1, 2], [0], [0]>} : vector<1x32x32xf32>, vector<1x32x64xf32>, vector<1x32x64xf32> -> vector<1x32x64xf32>
          "tpu.trace_stop"() : () -> ()
          %106 = arith.addf %104, %105 : vector<1x32x64xf32>
          scf.yield %77, %94, %102, %80, %98, %106 : vector<1x32x1xf32>, vector<1x32x1xf32>, vector<1x32x64xf32>, vector<1x32x1xf32>, vector<1x32x1xf32>, vector<1x32x64xf32>
        }
        %c2_i32_41 = arith.constant 2 : i32
        %44 = tpu.reciprocal %43#1 {approx = true} : vector<1x32x1xf32> -> vector<1x32x1xf32>
        %45 = tpu.reciprocal %43#4 {approx = true} : vector<1x32x1xf32> -> vector<1x32x1xf32>
        %46 = vector.broadcast %14 : f32 to vector<1x32x1xf32>
        %47 = arith.mulf %46, %45 : vector<1x32x1xf32>
        %48 = vector.broadcast %44 : vector<1x32x1xf32> to vector<1x32x64xf32>
        %49 = arith.mulf %43#2, %48 : vector<1x32x64xf32>
        %50 = vector.broadcast %47 : vector<1x32x1xf32> to vector<1x32x64xf32>
        %51 = arith.mulf %43#5, %50 : vector<1x32x64xf32>
        %52 = arith.subf %49, %51 : vector<1x32x64xf32>
        %53 = vector.shape_cast %52 : vector<1x32x64xf32> to vector<32x64xf32>
        %cst_42 = arith.constant dense<0.000000e+00> : vector<32x64xf32>
        %54 = tpu.matmul %53, %20, %cst_42 {dimension_numbers = #tpu.dot_dimension_numbers<[1], [0], [0], [1], [0, 0, 1, 1], [], []>} : vector<32x64xf32>, vector<64x64xf32>, vector<32x64xf32> -> vector<32x64xf32>
        %c0_43 = arith.constant 0 : index
        %55 = arith.index_cast %31 : i32 to index
        %c0_44 = arith.constant 0 : index
        %56 = vector.load %arg9[%c0_43, %55, %c0_44] : memref<1x64x64xf32, #tpu.memory_space<vmem>>, vector<1x32x64xf32>
        %57 = vector.shape_cast %54 : vector<32x64xf32> to vector<1x32x64xf32>
        %58 = arith.addf %56, %57 : vector<1x32x64xf32>
        %c0_45 = arith.constant 0 : index
        %59 = arith.index_cast %31 : i32 to index
        %c0_46 = arith.constant 0 : index
        %60 = vector.load %arg9[%c0_45, %59, %c0_46] : memref<1x64x64xf32, #tpu.memory_space<vmem>>, vector<1x32x64xf32>
        tpu.vector_store %arg9[%c0_45, %59, %c0_46], %58 {strides = array<i32>} : memref<1x64x64xf32, #tpu.memory_space<vmem>>, vector<1x32x64xf32>,
      }
      %c2_i32_28 = arith.constant 2 : i32
    }
    %c2_i32_5 = arith.constant 2 : i32
    %c0_6 = arith.constant 0 : index
    %c0_7 = arith.constant 0 : index
    %c0_8 = arith.constant 0 : index
    %5 = vector.load %arg9[%c0_6, %c0_7, %c0_8] : memref<1x64x64xf32, #tpu.memory_space<vmem>>, vector<1x64x64xf32>
    %c0_9 = arith.constant 0 : index
    %c0_10 = arith.constant 0 : index
    %6 = vector.load %arg6[%c0_9, %c0_10] : memref<1x64xf32, #tpu.memory_space<vmem>>, vector<1x64xf32>
    %7 = vector.shape_cast %6 : vector<1x64xf32> to vector<1x1x64xf32>
    %8 = vector.broadcast %7 : vector<1x1x64xf32> to vector<1x64x64xf32>
    %9 = arith.addf %5, %8 : vector<1x64x64xf32>
    %cst_11 = arith.constant 2.000000e-01 : f32
    %10 = vector.broadcast %cst_11 : f32 to vector<1x64x64xf32>
    %11 = arith.mulf %9, %10 : vector<1x64x64xf32>
    %c0_12 = arith.constant 0 : index
    %c0_13 = arith.constant 0 : index
    %c0_14 = arith.constant 0 : index
    %12 = vector.load %arg7[%c0_12, %c0_13, %c0_14] : memref<1x64x64xf32, #tpu.memory_space<vmem>>, vector<1x64x64xf32>
    tpu.vector_store %arg7[%c0_12, %c0_13, %c0_14], %11 {strides = array<i32>} : memref<1x64x64xf32, #tpu.memory_space<vmem>>, vector<1x64x64xf32>,
    return
  }
  func.func @transform_0(%arg0: i32) -> i32 {
    %c0_i32 = arith.constant 0 : i32
    %c0_i32_0 = arith.constant 0 : i32
    return %c0_i32 : i32
  }
  func.func @transform_1(%arg0: i32) -> (i32, i32, i32) {
    %c0_i32 = arith.constant 0 : i32
    %c0_i32_0 = arith.constant 0 : i32
    %c0_i32_1 = arith.constant 0 : i32
    return %arg0, %c0_i32, %c0_i32_0 : i32, i32, i32
  }
  func.func @transform_2(%arg0: i32) -> (i32, i32, i32) {
    %c0_i32 = arith.constant 0 : i32
    %c0_i32_0 = arith.constant 0 : i32
    %c0_i32_1 = arith.constant 0 : i32
    %c0_i32_2 = arith.constant 0 : i32
    return %c0_i32, %c0_i32_0, %c0_i32_1 : i32, i32, i32
  }
  func.func @transform_3(%arg0: i32) -> (i32, i32, i32) {
    %c0_i32 = arith.constant 0 : i32
    %c0_i32_0 = arith.constant 0 : i32
    %c0_i32_1 = arith.constant 0 : i32
    %c0_i32_2 = arith.constant 0 : i32
    return %c0_i32, %c0_i32_0, %c0_i32_1 : i32, i32, i32
  }
  func.func @transform_4(%arg0: i32) -> (i32, i32, i32) {
    %c0_i32 = arith.constant 0 : i32
    %c0_i32_0 = arith.constant 0 : i32
    %c0_i32_1 = arith.constant 0 : i32
    %c0_i32_2 = arith.constant 0 : i32
    return %c0_i32, %c0_i32_0, %c0_i32_1 : i32, i32, i32
  }
  func.func @transform_5(%arg0: i32) -> (i32, i32) {
    %c0_i32 = arith.constant 0 : i32
    %c0_i32_0 = arith.constant 0 : i32
    %c0_i32_1 = arith.constant 0 : i32
    return %c0_i32, %c0_i32_0 : i32, i32
  }
  func.func @transform_6(%arg0: i32) -> (i32, i32, i32) {
    %c0_i32 = arith.constant 0 : i32
    %c0_i32_0 = arith.constant 0 : i32
    %c0_i32_1 = arith.constant 0 : i32
    return %arg0, %c0_i32, %c0_i32_0 : i32, i32, i32
  }
}

</mosaic_0001>

<llo_original>
// kernel: multi_head_diff_attention.1
$region0: #{multi_head_diff_attention.1}
  #allocation0 [shape = 'u32[]', space=smem, size = 0x4, offset = 0x4, fixed_abs, tag = 'smem constant byte address 0x4 - core index']
  #allocation1 [shape = 'u32[144,128]{1,0:T(1,128)}', space=vmem, size = 0x12000, scoped, tag = 'internal scratch']
  #allocation2 [shape = 'f32[1,64,320]{2,1,0:T(8,128)}', space=vmem, size = 0x18000, scoped, tag = 'scratch operand']
  #allocation3 [shape = 'f32[1,64,64]{2,1,0:T(8,128)}', space=vmem, size = 0x8000, scoped, tag = 'scratch operand']
  %s0 = inlined_call_operand.vmem [shape: f32[2], index: 0, kind: input, shape index: {}]
  %s1 = inlined_call_operand.vmem [shape: f32[2,64,64], index: 1, kind: input, shape index: {}]
  %s2 = inlined_call_operand.vmem [shape: f32[2,64,320], index: 2, kind: input, shape index: {}]
  %s3 = inlined_call_operand.vmem [shape: f32[2,64,64], index: 3, kind: input, shape index: {}]
  %s4 = inlined_call_operand.vmem [shape: f32[2,1,320], index: 4, kind: input, shape index: {}]
  %s5 = inlined_call_operand.vmem [shape: f32[1,64], index: 5, kind: input, shape index: {}]
  %s6 = inlined_call_operand.hbm [shape: f32[2,64,64], index: 6, kind: output, shape index: {}]
  %s7 = sld [smem:[#allocation0]]
  $region82: #{multi_head_diff_attention.1} parent=0
    _
  %s9 = ssub.s32 1, %s7
  %s10 = scalar_select 0, %s9, %s7
  $region1: #{multi_head_diff_attention.1} parent=0
    #allocation4 [shape = 'u8[512]{0}', space=smem, size = 0x200, scoped, tag = 'input window, operand 0, single buffered']
    #allocation5 [shape = 's32[2]{0}', space=sflag, size = 0x8, scoped, tag = 'scoped memory for multi_head_diff_attention.1']
    #allocation6 [shape = 's32[2]{0}', space=sflag, size = 0x8, scoped, tag = 'scoped memory for multi_head_diff_attention.1']
    #allocation7 [shape = 'u8[65536]{0}', space=vmem, size = 0x10000, scoped, tag = 'output window, operand 0']
    %11 = vsyncpa [#allocation6], 0
    %12 = vsyncpa [#allocation5], 0
    %s13 = scalar_lea.sflag [#allocation5], 1
    %14 = vsyncpa %s13, 0
    loop: start=0, step=1, limit=4
    $region2: #{multi_head_diff_attention.1} parent=1 // loop_pre_header
      _
    $region3: #{multi_head_diff_attention.1} parent=1 // loop_header
      %s16 = sphi 0, %s20
      %p17 = scmp.ge.s32.totalorder %s16, 4
      %s24 = sphi 0, %s24
      %s26 = sphi 0, %s24
      %s27 = sphi 0, %s26
      %s41 = sphi 0, %s27
      %s47 = sphi 0, %s49
      %s50 = sphi 0, %s47
      %s51 = sphi 0, %s50
      %s67 = sphi 0, %s51
      %s71 = sphi 0, %s71
      %s73 = sphi 0, %s71
      %s74 = sphi 0, %s73
      %s88 = sphi 0, %s74
      %s92 = sphi 0, %s92
      %s94 = sphi 0, %s92
      %s95 = sphi 0, %s94
      %s109 = sphi 0, %s95
      %s113 = sphi 0, %s113
      %s115 = sphi 0, %s113
      %s116 = sphi 0, %s115
      %s130 = sphi 0, %s116
      %s134 = sphi 0, %s134
      %s136 = sphi 0, %s134
      %s137 = sphi 0, %s136
      %s151 = sphi 0, %s137
      %s157 = sphi 0, %s159
      %s160 = sphi 0, %s157
      %s161 = sphi 0, %s160
      %s177 = sphi 0, %s161
    $region4: #{multi_head_diff_attention.1} parent=1 // loop_header_branch
      %19 = sbr.rel (%p17) target = $region8
    $region5: #{multi_head_diff_attention.1} parent=1 // loop_body
      %s21 = ssub.s32 %s16, 1
      %s22 = ssub.s32 %s16, 2
      %s23 = sadd.s32 %s16, 1
      %s25 = sadd.s32 %s24, 1
      %p28 = scmp.eq.s32.totalorder %s16, 1
      %p29 = scmp.ne.s32.totalorder %s24, %s26
      %p30 = scmp.eq.s32.totalorder %s16, 0
      %p31 = por %p29, %p30
      %p32 = scmp.ne.s32.totalorder %s24, %s26
      %p33 = scmp.eq.s32.totalorder %s21, 1
      %p34 = por %p32, %p33
      %p35 = scmp.ne.s32.totalorder %s26, %s27
      %p36 = scmp.eq.s32.totalorder %s21, 0
      %p37 = por %p35, %p36
      %p38 = scmp.ne.s32.totalorder %s26, %s27
      %p39 = scmp.eq.s32.totalorder %s22, 1
      %p40 = por %p38, %p39
      %p42 = scmp.ne.s32.totalorder %s27, %s41
      %p43 = scmp.eq.s32.totalorder %s22, 0
      %p44 = por %p42, %p43
      %s45 = ssub.s32 %s16, %s23
      %p46 = scmp.eq.s32.totalorder %s45, 0
      %s48 = sadd.s32 %s47, 1
      %s49 = scalar_select %p46, %s47, %s48
      %p52 = pneg %p46
      %p53 = scmp.eq.s32.totalorder %s16, 1
      %p54 = por %p52, %p53
      %p55 = scmp.ne.s32.totalorder %s47, %s50
      %p56 = scmp.eq.s32.totalorder %s16, 0
      %p57 = por %p55, %p56
      %p58 = scmp.ne.s32.totalorder %s47, %s50
      %p59 = scmp.eq.s32.totalorder %s21, 1
      %p60 = por %p58, %p59
      %p61 = scmp.ne.s32.totalorder %s50, %s51
      %p62 = scmp.eq.s32.totalorder %s21, 0
      %p63 = por %p61, %p62
      %p64 = scmp.ne.s32.totalorder %s50, %s51
      %p65 = scmp.eq.s32.totalorder %s22, 1
      %p66 = por %p64, %p65
      %p68 = scmp.ne.s32.totalorder %s51, %s67
      %p69 = scmp.eq.s32.totalorder %s22, 0
      %p70 = por %p68, %p69
      %s72 = sadd.s32 %s71, 1
      %p75 = scmp.eq.s32.totalorder %s16, 1
      %p76 = scmp.ne.s32.totalorder %s71, %s73
      %p77 = scmp.eq.s32.totalorder %s16, 0
      %p78 = por %p76, %p77
      %p79 = scmp.ne.s32.totalorder %s71, %s73
      %p80 = scmp.eq.s32.totalorder %s21, 1
      %p81 = por %p79, %p80
      %p82 = scmp.ne.s32.totalorder %s73, %s74
      %p83 = scmp.eq.s32.totalorder %s21, 0
      %p84 = por %p82, %p83
      %p85 = scmp.ne.s32.totalorder %s73, %s74
      %p86 = scmp.eq.s32.totalorder %s22, 1
      %p87 = por %p85, %p86
      %p89 = scmp.ne.s32.totalorder %s74, %s88
      %p90 = scmp.eq.s32.totalorder %s22, 0
      %p91 = por %p89, %p90
      %s93 = sadd.s32 %s92, 1
      %p96 = scmp.eq.s32.totalorder %s16, 1
      %p97 = scmp.ne.s32.totalorder %s92, %s94
      %p98 = scmp.eq.s32.totalorder %s16, 0
      %p99 = por %p97, %p98
      %p100 = scmp.ne.s32.totalorder %s92, %s94
      %p101 = scmp.eq.s32.totalorder %s21, 1
      %p102 = por %p100, %p101
      %p103 = scmp.ne.s32.totalorder %s94, %s95
      %p104 = scmp.eq.s32.totalorder %s21, 0
      %p105 = por %p103, %p104
      %p106 = scmp.ne.s32.totalorder %s94, %s95
      %p107 = scmp.eq.s32.totalorder %s22, 1
      %p108 = por %p106, %p107
      %p110 = scmp.ne.s32.totalorder %s95, %s109
      %p111 = scmp.eq.s32.totalorder %s22, 0
      %p112 = por %p110, %p111
      %s114 = sadd.s32 %s113, 1
      %p117 = scmp.eq.s32.totalorder %s16, 1
      %p118 = scmp.ne.s32.totalorder %s113, %s115
      %p119 = scmp.eq.s32.totalorder %s16, 0
      %p120 = por %p118, %p119
      %p121 = scmp.ne.s32.totalorder %s113, %s115
      %p122 = scmp.eq.s32.totalorder %s21, 1
      %p123 = por %p121, %p122
      %p124 = scmp.ne.s32.totalorder %s115, %s116
      %p125 = scmp.eq.s32.totalorder %s21, 0
      %p126 = por %p124, %p125
      %p127 = scmp.ne.s32.totalorder %s115, %s116
      %p128 = scmp.eq.s32.totalorder %s22, 1
      %p129 = por %p127, %p128
      %p131 = scmp.ne.s32.totalorder %s116, %s130
      %p132 = scmp.eq.s32.totalorder %s22, 0
      %p133 = por %p131, %p132
      %s135 = sadd.s32 %s134, 1
      %p138 = scmp.eq.s32.totalorder %s16, 1
      %p139 = scmp.ne.s32.totalorder %s134, %s136
      %p140 = scmp.eq.s32.totalorder %s16, 0
      %p141 = por %p139, %p140
      %p142 = scmp.ne.s32.totalorder %s134, %s136
      %p143 = scmp.eq.s32.totalorder %s21, 1
      %p144 = por %p142, %p143
      %p145 = scmp.ne.s32.totalorder %s136, %s137
      %p146 = scmp.eq.s32.totalorder %s21, 0
      %p147 = por %p145, %p146
      %p148 = scmp.ne.s32.totalorder %s136, %s137
      %p149 = scmp.eq.s32.totalorder %s22, 1
      %p150 = por %p148, %p149
      %p152 = scmp.ne.s32.totalorder %s137, %s151
      %p153 = scmp.eq.s32.totalorder %s22, 0
      %p154 = por %p152, %p153
      %s155 = ssub.s32 %s16, %s23
      %p156 = scmp.eq.s32.totalorder %s155, 0
      %s158 = sadd.s32 %s157, 1
      %s159 = scalar_select %p156, %s157, %s158
      %p162 = pneg %p156
      %p163 = scmp.eq.s32.totalorder %s16, 1
      %p164 = por %p162, %p163
      %p165 = scmp.ne.s32.totalorder %s157, %s160
      %p166 = scmp.eq.s32.totalorder %s16, 0
      %p167 = por %p165, %p166
      %p168 = scmp.ne.s32.totalorder %s157, %s160
      %p169 = scmp.eq.s32.totalorder %s21, 1
      %p170 = por %p168, %p169
      %p171 = scmp.ne.s32.totalorder %s160, %s161
      %p172 = scmp.eq.s32.totalorder %s21, 0
      %p173 = por %p171, %p172
      %p174 = scmp.ne.s32.totalorder %s160, %s161
      %p175 = scmp.eq.s32.totalorder %s22, 1
      %p176 = por %p174, %p175
      %p178 = scmp.ne.s32.totalorder %s161, %s177
      %p179 = scmp.eq.s32.totalorder %s22, 0
      %p180 = por %p178, %p179
      %p181 = scmp.le.s32.totalorder 1, %s16
      %p182 = scmp.lt.s32.totalorder %s16, 3
      %p183 = pnand %p181, %p182
      %p184 = pneg %p183
      // Predicated region
      $region9: #{multi_head_diff_attention.1} parent=5 // pred_check
        _
      $region10: #{multi_head_diff_attention.1} parent=5 // pred_check_branch
        %186 = sbr.rel (%p183) target = $region12
      $region11: #{multi_head_diff_attention.1} parent=5 // pred_region
        %s187 = ssub.s32 %s16, 1
        // Predicated region
        $region13: #{multi_head_diff_attention.1} parent=11 // pred_check
          %p188 = pneg %p37
        $region14: #{multi_head_diff_attention.1} parent=11 // pred_check_branch
          %190 = sbr.rel (%p188) target = $region16
        $region15: #{multi_head_diff_attention.1} parent=11 // pred_region
          %s192 = ssub.s32 16, 16
          %193 = vsyncadd [#allocation6], %s192
          %s195 = sshll.u32 %s0, 4
          %s196 = int_to_ptr.vmem [resolvable:$true] %s195
          %198 = dma.vmem_to_smem %s196, 16, [#allocation4], [#allocation6]
        $region16: #{multi_head_diff_attention.1} parent=11 // pred_fallthru
          _
        // Predicated region
        $region17: #{multi_head_diff_attention.1} parent=11 // pred_check
          %p199 = pneg %p84
        $region18: #{multi_head_diff_attention.1} parent=11 // pred_check_branch
          %201 = sbr.rel (%p199) target = $region20
        $region19: #{multi_head_diff_attention.1} parent=11 // pred_region
          _
        $region20: #{multi_head_diff_attention.1} parent=11 // pred_fallthru
          _
        // Predicated region
        $region21: #{multi_head_diff_attention.1} parent=11 // pred_check
          %p202 = pneg %p105
        $region22: #{multi_head_diff_attention.1} parent=11 // pred_check_branch
          %204 = sbr.rel (%p202) target = $region24
        $region23: #{multi_head_diff_attention.1} parent=11 // pred_region
          _
        $region24: #{multi_head_diff_attention.1} parent=11 // pred_fallthru
          _
        // Predicated region
        $region25: #{multi_head_diff_attention.1} parent=11 // pred_check
          %p205 = pneg %p126
        $region26: #{multi_head_diff_attention.1} parent=11 // pred_check_branch
          %207 = sbr.rel (%p205) target = $region28
        $region27: #{multi_head_diff_attention.1} parent=11 // pred_region
          _
        $region28: #{multi_head_diff_attention.1} parent=11 // pred_fallthru
          _
        // Predicated region
        $region29: #{multi_head_diff_attention.1} parent=11 // pred_check
          %p208 = pneg %p147
        $region30: #{multi_head_diff_attention.1} parent=11 // pred_check_branch
          %210 = sbr.rel (%p208) target = $region32
        $region31: #{multi_head_diff_attention.1} parent=11 // pred_region
          _
        $region32: #{multi_head_diff_attention.1} parent=11 // pred_fallthru
          _
      $region12: #{multi_head_diff_attention.1} parent=5 // pred_fallthru
        _
      %p211 = scmp.lt.s32.totalorder %s16, 2
      // Predicated region
      $region33: #{multi_head_diff_attention.1} parent=5 // pred_check
        %p212 = pneg %p211
      $region34: #{multi_head_diff_attention.1} parent=5 // pred_check_branch
        %214 = sbr.rel (%p212) target = $region36
      $region35: #{multi_head_diff_attention.1} parent=5 // pred_region
        // Predicated region
        $region37: #{multi_head_diff_attention.1} parent=35 // pred_check
          %p215 = pneg %p57
        $region38: #{multi_head_diff_attention.1} parent=35 // pred_check_branch
          %217 = sbr.rel (%p215) target = $region40
        $region39: #{multi_head_diff_attention.1} parent=35 // pred_region
          %p218 = scmp.lt.s32.totalorder %s16, 1
          %s219 = scalar_select %p218, %s16, 1
          %s220 = smul.addr %s219, 8
          %s221 = smul.addr %s220, 8
          %s222 = scalar_lea.vmem %s1, %s221
        $region40: #{multi_head_diff_attention.1} parent=35 // pred_fallthru
          _
      $region36: #{multi_head_diff_attention.1} parent=5 // pred_fallthru
        _
      %p223 = scmp.le.s32.totalorder 1, %s16
      %p224 = scmp.lt.s32.totalorder %s16, 3
      %p225 = pnand %p223, %p224
      %p226 = pneg %p225
      // Predicated region
      $region41: #{multi_head_diff_attention.1} parent=5 // pred_check
        _
      $region42: #{multi_head_diff_attention.1} parent=5 // pred_check_branch
        %228 = sbr.rel (%p225) target = $region44
      $region43: #{multi_head_diff_attention.1} parent=5 // pred_region
        %s229 = ssub.s32 %s16, 1
        // Predicated region
        $region45: #{multi_head_diff_attention.1} parent=43 // pred_check
          %p230 = pneg %p37
        $region46: #{multi_head_diff_attention.1} parent=43 // pred_check_branch
          %232 = sbr.rel (%p230) target = $region48
        $region47: #{multi_head_diff_attention.1} parent=43 // pred_region
          %233 = dma.done [#allocation6], 16
        $region48: #{multi_head_diff_attention.1} parent=43 // pred_fallthru
          _
        %234 = sfence
        %p235 = pneg %p37
        %p236 = pneg %p34
        %p237 = scmp.lt.s32.totalorder %s21, 1
        %s238 = scalar_select %p237, %s21, 1
        %s239 = smul.addr %s238, 8
        %s240 = smul.addr %s239, 8
        %s241 = scalar_lea.vmem %s1, %s240
        %p242 = pneg %p63
        %p243 = pneg %p60
        %p244 = pneg %p84
        %p245 = pneg %p81
        %p246 = pneg %p105
        %p247 = pneg %p102
        %p248 = pneg %p126
        %p249 = pneg %p123
        %p250 = pneg %p147
        %p251 = pneg %p144
        %p252 = pneg %p173
        %p253 = pneg %p170
        %s254 = sand.u32 %s160, 1
        %s255 = scalar_lea.sflag [#allocation5], %s254
        %s256 = sand.u32 %s160, 1
        %s257 = smul.addr %s256, 64
        %s258 = scalar_lea.vmem [#allocation7], %s257
        %p259 = scmp.lt.s32.totalorder %s21, 1
        %s260 = scalar_select %p259, %s21, 1
        %s261 = smul.addr %s260, 8
        %s262 = smul.addr %s261, 8
        %s263 = scalar_lea.vmem %s1, %s262
        %v264 = vld [vmem:[%s263] sm:$0xff]
        %v265 = vld [vmem:[%s263 + $0x8] sm:$0xff]
        %v266 = vld [vmem:[%s263 + $0x10] sm:$0xff]
        %v267 = vld [vmem:[%s263 + $0x18] sm:$0xff]
        %v268 = vld [vmem:[%s263 + $0x20] sm:$0xff]
        %v269 = vld [vmem:[%s263 + $0x28] sm:$0xff]
        %v270 = vld [vmem:[%s263 + $0x30] sm:$0xff]
        %v271 = vld [vmem:[%s263 + $0x38] sm:$0xff]
        %vm272 = vcmask 523264
        %273 = vst.msk [vmem:[#allocation3] sm:$0xff] %vm272, 0.0
        %274 = vst.msk [vmem:[#allocation3 + $0x8] sm:$0xff] %vm272, 0.0
        %275 = vst.msk [vmem:[#allocation3 + $0x10] sm:$0xff] %vm272, 0.0
        %276 = vst.msk [vmem:[#allocation3 + $0x18] sm:$0xff] %vm272, 0.0
        %277 = vst.msk [vmem:[#allocation3 + $0x20] sm:$0xff] %vm272, 0.0
        %278 = vst.msk [vmem:[#allocation3 + $0x28] sm:$0xff] %vm272, 0.0
        %279 = vst.msk [vmem:[#allocation3 + $0x30] sm:$0xff] %vm272, 0.0
        %280 = vst.msk [vmem:[#allocation3 + $0x38] sm:$0xff] %vm272, 0.0
        loop: start=0, step=1, limit=2
        $region49: #{multi_head_diff_attention.1} parent=43 // loop_pre_header
          _
        $region50: #{multi_head_diff_attention.1} parent=43 // loop_header
          %s282 = sphi 0, %s286
          %p283 = scmp.ge.s32.totalorder %s282, 2
        $region51: #{multi_head_diff_attention.1} parent=43 // loop_header_branch
          %285 = sbr.rel (%p283) target = $region55
        $region52: #{multi_head_diff_attention.1} parent=43 // loop_body
          %s287 = sld [smem:[#allocation4 + %s282]]
          %s288 = smul.u32 %s282, 24
          %s289 = smul.addr %s288, 8
          %s290 = scalar_lea.vmem %s2, %s289
          %v291 = vld [vmem:[%s290] sm:$0xff]
          %v292 = vld [vmem:[%s290 + $0x8] sm:$0xff]
          %v293 = vld [vmem:[%s290 + $0x10] sm:$0xff]
          %v294 = vld [vmem:[%s290 + $0x18] sm:$0xff]
          %v295 = vld [vmem:[%s290 + $0x20] sm:$0xff]
          %v296 = vld [vmem:[%s290 + $0x28] sm:$0xff]
          %v297 = vld [vmem:[%s290 + $0x30] sm:$0xff]
          %v298 = vld [vmem:[%s290 + $0x38] sm:$0xff]
          %v299 = vld [vmem:[%s290 + $0x40] sm:$0xff]
          %v300 = vld [vmem:[%s290 + $0x48] sm:$0xff]
          %v301 = vld [vmem:[%s290 + $0x50] sm:$0xff]
          %v302 = vld [vmem:[%s290 + $0x58] sm:$0xff]
          %v303 = vld [vmem:[%s290 + $0x60] sm:$0xff]
          %v304 = vld [vmem:[%s290 + $0x68] sm:$0xff]
          %v305 = vld [vmem:[%s290 + $0x70] sm:$0xff]
          %v306 = vld [vmem:[%s290 + $0x78] sm:$0xff]
          %v307 = vld [vmem:[%s290 + $0x80] sm:$0xff]
          %v308 = vld [vmem:[%s290 + $0x88] sm:$0xff]
          %v309 = vld [vmem:[%s290 + $0x90] sm:$0xff]
          %v310 = vld [vmem:[%s290 + $0x98] sm:$0xff]
          %v311 = vld [vmem:[%s290 + $0xa0] sm:$0xff]
          %v312 = vld [vmem:[%s290 + $0xa8] sm:$0xff]
          %v313 = vld [vmem:[%s290 + $0xb0] sm:$0xff]
          %v314 = vld [vmem:[%s290 + $0xb8] sm:$0xff]
          %s315 = smul.u32 %s282, 64
          %s316 = scalar_lea.vmem %s3, %s315
          %v317 = vld [vmem:[%s316] sm:$0xff]
          %v318 = vld [vmem:[%s316 + $0x8] sm:$0xff]
          %v319 = vld [vmem:[%s316 + $0x10] sm:$0xff]
          %v320 = vld [vmem:[%s316 + $0x18] sm:$0xff]
          %v321 = vld [vmem:[%s316 + $0x20] sm:$0xff]
          %v322 = vld [vmem:[%s316 + $0x28] sm:$0xff]
          %v323 = vld [vmem:[%s316 + $0x30] sm:$0xff]
          %v324 = vld [vmem:[%s316 + $0x38] sm:$0xff]
          %s325 = smul.u32 %s282, 3
          %s326 = scalar_lea.vmem %s4, %s325
          %v327 = vld [vmem:[%s326] sm:$0x7]
          %v329 = vlaneseq
          %v330 = vshrl.u32 %v329, 7
          %v331 = vsub.s32 0, %v330
          %v332 = vrot.slane %v327, %v331
          %v333 = vlaneseq
          %v334 = vshrl.u32 %v333, 7
          %v335 = vsub.s32 1, %v334
          %v336 = vrot.slane %v327, %v335
          %v337 = vlaneseq
          %v338 = vshrl.u32 %v337, 7
          %v339 = vsub.s32 2, %v338
          %v340 = vrot.slane %v327, %v339
          %v345 = vsel %vm272, %v264, 0
          %v348 = vsel %vm272, %v265, 0
          %v351 = vsel %vm272, %v266, 0
          %v354 = vsel %vm272, %v267, 0
          %v357 = vsel %vm272, %v268, 0
          %v360 = vsel %vm272, %v269, 0
          %v363 = vsel %vm272, %v270, 0
          %v366 = vsel %vm272, %v271, 0
          %368 = vmatprep.subr.mxu0 0.0
          %369 = vmatpush1.msra.mxu0 0.0
          %370 = vmatprep.subr.mxu0 0.0
          %371 = vmatpush1.msra.mxu0 0.0
          %372 = vmatprep.subr.mxu0 0.0
          %373 = vmatpush1.msra.mxu0 0.0
          %374 = vmatprep.subr.mxu0 0.0
          %375 = vmatpush1.msra.mxu0 0.0
          %376 = vmatprep.subr.mxu0 0.0
          %377 = vmatpush1.msra.mxu0 0.0
          %378 = vmatprep.subr.mxu0 0.0
          %379 = vmatpush1.msra.mxu0 0.0
          %380 = vmatprep.subr.mxu0 0.0
          %381 = vmatpush1.msra.mxu0 0.0
          %382 = vmatprep.subr.mxu0 0.0
          %383 = vmatpush1.msra.mxu0 0.0
          %384 = vmatprep.subr.mxu0 %v313
          %385 = vmatpush1.msra.mxu0 %v312
          %386 = vmatprep.subr.mxu0 %v310
          %387 = vmatpush1.msra.mxu0 %v309
          %388 = vmatprep.subr.mxu0 %v307
          %389 = vmatpush1.msra.mxu0 %v306
          %390 = vmatprep.subr.mxu0 %v304
          %391 = vmatpush1.msra.mxu0 %v303
          %392 = vmatprep.subr.mxu0 %v301
          %393 = vmatpush1.msra.mxu0 %v300
          %394 = vmatprep.subr.mxu0 %v298
          %395 = vmatpush1.msra.mxu0 %v297
          %396 = vmatprep.subr.mxu0 %v295
          %397 = vmatpush1.msra.mxu0 %v294
          %398 = vmatprep.subr.mxu0 %v292
          %399 = vmatpush1.msra.mxu0 %v291
          %400 = vmatprep.subr.mxu0 0.0
          %401 = vmatpush2.msra.mxu0 0.0
          %402 = vmatprep.subr.mxu0 0.0
          %403 = vmatpush2.msra.mxu0 0.0
          %404 = vmatprep.subr.mxu0 0.0
          %405 = vmatpush2.msra.mxu0 0.0
          %406 = vmatprep.subr.mxu0 0.0
          %407 = vmatpush2.msra.mxu0 0.0
          %408 = vmatprep.subr.mxu0 0.0
          %409 = vmatpush2.msra.mxu0 0.0
          %410 = vmatprep.subr.mxu0 0.0
          %411 = vmatpush2.msra.mxu0 0.0
          %412 = vmatprep.subr.mxu0 0.0
          %413 = vmatpush2.msra.mxu0 0.0
          %414 = vmatprep.subr.mxu0 0.0
          %415 = vmatpush2.msra.mxu0 0.0
          %416 = vmatprep.subr.mxu0 0.0
          %417 = vmatpush2.msra.mxu0 0.0
          %418 = vmatprep.subr.mxu0 0.0
          %419 = vmatpush2.msra.mxu0 0.0
          %420 = vmatprep.subr.mxu0 0.0
          %421 = vmatpush2.msra.mxu0 0.0
          %422 = vmatprep.subr.mxu0 0.0
          %423 = vmatpush2.msra.mxu0 0.0
          %424 = vmatprep.subr.mxu0 0.0
          %425 = vmatpush2.msra.mxu0 0.0
          %426 = vmatprep.subr.mxu0 0.0
          %427 = vmatpush2.msra.mxu0 0.0
          %428 = vmatprep.subr.mxu0 0.0
          %429 = vmatpush2.msra.mxu0 0.0
          %430 = vmatprep.subr.mxu0 0.0
          %431 = vmatpush2.msra.mxu0 0.0
          %432 = vmatprep.mubr.f32.mxu0 0.0
          %433 = vmatmul.mubr.f32.gmra.mxu0 %v345
          %v434 = vpop.f32.mrf.mxu0
          %v435 = vadd.f32 %v332, %v434
          %v436 = vpop.f32.mrf.mxu0
          %v437 = vadd.f32 %v336, %v436
          %438 = vmatprep.mubr.f32.mxu0 0.0
          %439 = vmatmul.mubr.f32.gmra.mxu0 %v348
          %v440 = vpop.f32.mrf.mxu0
          %v441 = vadd.f32 %v332, %v440
          %v442 = vpop.f32.mrf.mxu0
          %v443 = vadd.f32 %v336, %v442
          %444 = vmatprep.mubr.f32.mxu0 0.0
          %445 = vmatmul.mubr.f32.gmra.mxu0 %v351
          %v446 = vpop.f32.mrf.mxu0
          %v447 = vadd.f32 %v332, %v446
          %v448 = vpop.f32.mrf.mxu0
          %v449 = vadd.f32 %v336, %v448
          %450 = vmatprep.mubr.f32.mxu0 0.0
          %451 = vmatmul.mubr.f32.gmra.mxu0 %v354
          %v452 = vpop.f32.mrf.mxu0
          %v453 = vadd.f32 %v332, %v452
          %v454 = vpop.f32.mrf.mxu0
          %v455 = vadd.f32 %v336, %v454
          %456 = vmatprep.mubr.f32.mxu0 0.0
          %457 = vmatmul.mubr.f32.gmra.mxu0 %v357
          %v458 = vpop.f32.mrf.mxu0
          %v459 = vadd.f32 %v332, %v458
          %v460 = vpop.f32.mrf.mxu0
          %v461 = vadd.f32 %v336, %v460
          %462 = vmatprep.mubr.f32.mxu0 0.0
          %463 = vmatmul.mubr.f32.gmra.mxu0 %v360
          %v464 = vpop.f32.mrf.mxu0
          %v465 = vadd.f32 %v332, %v464
          %v466 = vpop.f32.mrf.mxu0
          %v467 = vadd.f32 %v336, %v466
          %468 = vmatprep.mubr.f32.mxu0 0.0
          %469 = vmatmul.mubr.f32.gmra.mxu0 %v363
          %v470 = vpop.f32.mrf.mxu0
          %v471 = vadd.f32 %v332, %v470
          %v472 = vpop.f32.mrf.mxu0
          %v473 = vadd.f32 %v336, %v472
          %474 = vmatprep.mubr.f32.mxu0 0.0
          %475 = vmatmul.mubr.f32.gmra.mxu0 %v366
          %v476 = vpop.f32.mrf.mxu0
          %v477 = vadd.f32 %v332, %v476
          %v478 = vpop.f32.mrf.mxu0
          %v479 = vadd.f32 %v336, %v478
          %480 = vdwg.mxu0
          %481 = vmatprep.subr.mxu0 0.0
          %482 = vmatpush1.msra.mxu0 0.0
          %483 = vmatprep.subr.mxu0 0.0
          %484 = vmatpush1.msra.mxu0 0.0
          %485 = vmatprep.subr.mxu0 0.0
          %486 = vmatpush1.msra.mxu0 0.0
          %487 = vmatprep.subr.mxu0 0.0
          %488 = vmatpush1.msra.mxu0 0.0
          %489 = vmatprep.subr.mxu0 0.0
          %490 = vmatpush1.msra.mxu0 0.0
          %491 = vmatprep.subr.mxu0 0.0
          %492 = vmatpush1.msra.mxu0 0.0
          %493 = vmatprep.subr.mxu0 0.0
          %494 = vmatpush1.msra.mxu0 0.0
          %495 = vmatprep.subr.mxu0 0.0
          %496 = vmatpush1.msra.mxu0 0.0
          %497 = vmatprep.subr.mxu0 0.0
          %498 = vmatpush1.msra.mxu0 %v314
          %499 = vmatprep.subr.mxu0 0.0
          %500 = vmatpush1.msra.mxu0 %v311
          %501 = vmatprep.subr.mxu0 0.0
          %502 = vmatpush1.msra.mxu0 %v308
          %503 = vmatprep.subr.mxu0 0.0
          %504 = vmatpush1.msra.mxu0 %v305
          %505 = vmatprep.subr.mxu0 0.0
          %506 = vmatpush1.msra.mxu0 %v302
          %507 = vmatprep.subr.mxu0 0.0
          %508 = vmatpush1.msra.mxu0 %v299
          %509 = vmatprep.subr.mxu0 0.0
          %510 = vmatpush1.msra.mxu0 %v296
          %511 = vmatprep.subr.mxu0 0.0
          %512 = vmatpush1.msra.mxu0 %v293
          %513 = vmatprep.subr.mxu0 0.0
          %514 = vmatpush2.msra.mxu0 0.0
          %515 = vmatprep.subr.mxu0 0.0
          %516 = vmatpush2.msra.mxu0 0.0
          %517 = vmatprep.subr.mxu0 0.0
          %518 = vmatpush2.msra.mxu0 0.0
          %519 = vmatprep.subr.mxu0 0.0
          %520 = vmatpush2.msra.mxu0 0.0
          %521 = vmatprep.subr.mxu0 0.0
          %522 = vmatpush2.msra.mxu0 0.0
          %523 = vmatprep.subr.mxu0 0.0
          %524 = vmatpush2.msra.mxu0 0.0
          %525 = vmatprep.subr.mxu0 0.0
          %526 = vmatpush2.msra.mxu0 0.0
          %527 = vmatprep.subr.mxu0 0.0
          %528 = vmatpush2.msra.mxu0 0.0
          %529 = vmatprep.subr.mxu0 0.0
          %530 = vmatpush2.msra.mxu0 0.0
          %531 = vmatprep.subr.mxu0 0.0
          %532 = vmatpush2.msra.mxu0 0.0
          %533 = vmatprep.subr.mxu0 0.0
          %534 = vmatpush2.msra.mxu0 0.0
          %535 = vmatprep.subr.mxu0 0.0
          %536 = vmatpush2.msra.mxu0 0.0
          %537 = vmatprep.subr.mxu0 0.0
          %538 = vmatpush2.msra.mxu0 0.0
          %539 = vmatprep.subr.mxu0 0.0
          %540 = vmatpush2.msra.mxu0 0.0
          %541 = vmatprep.subr.mxu0 0.0
          %542 = vmatpush2.msra.mxu0 0.0
          %543 = vmatprep.subr.mxu0 0.0
          %544 = vmatpush2.msra.mxu0 0.0
          %545 = vmatprep.mubr.f32.mxu0 0.0
          %546 = vmatmul.mubr.f32.gmra.mxu0 %v345
          %v547 = vpop.f32.mrf.mxu0
          %v548 = vadd.f32 %v340, %v547
          %v549 = vpop.f32.mrf.mxu0
          %550 = vmatprep.mubr.f32.mxu0 0.0
          %551 = vmatmul.mubr.f32.gmra.mxu0 %v348
          %v552 = vpop.f32.mrf.mxu0
          %v553 = vadd.f32 %v340, %v552
          %v554 = vpop.f32.mrf.mxu0
          %555 = vmatprep.mubr.f32.mxu0 0.0
          %556 = vmatmul.mubr.f32.gmra.mxu0 %v351
          %v557 = vpop.f32.mrf.mxu0
          %v558 = vadd.f32 %v340, %v557
          %v559 = vpop.f32.mrf.mxu0
          %560 = vmatprep.mubr.f32.mxu0 0.0
          %561 = vmatmul.mubr.f32.gmra.mxu0 %v354
          %v562 = vpop.f32.mrf.mxu0
          %v563 = vadd.f32 %v340, %v562
          %v564 = vpop.f32.mrf.mxu0
          %565 = vmatprep.mubr.f32.mxu0 0.0
          %566 = vmatmul.mubr.f32.gmra.mxu0 %v357
          %v567 = vpop.f32.mrf.mxu0
          %v568 = vadd.f32 %v340, %v567
          %v569 = vpop.f32.mrf.mxu0
          %570 = vmatprep.mubr.f32.mxu0 0.0
          %571 = vmatmul.mubr.f32.gmra.mxu0 %v360
          %v572 = vpop.f32.mrf.mxu0
          %v573 = vadd.f32 %v340, %v572
          %v574 = vpop.f32.mrf.mxu0
          %575 = vmatprep.mubr.f32.mxu0 0.0
          %576 = vmatmul.mubr.f32.gmra.mxu0 %v363
          %v577 = vpop.f32.mrf.mxu0
          %v578 = vadd.f32 %v340, %v577
          %v579 = vpop.f32.mrf.mxu0
          %580 = vmatprep.mubr.f32.mxu0 0.0
          %581 = vmatmul.mubr.f32.gmra.mxu0 %v366
          %v582 = vpop.f32.mrf.mxu0
          %v583 = vadd.f32 %v340, %v582
          %v584 = vpop.f32.mrf.mxu0
          %585 = vdwg.mxu0
          %586 = vst [vmem:[#allocation2] sm:$0xff] %v435
          %587 = vst [vmem:[#allocation2 + $0x8] sm:$0xff] %v437
          %588 = vst.msk [vmem:[#allocation2 + $0x10] sm:$0xff] %vm272, %v548
          %589 = vst [vmem:[#allocation2 + $0x18] sm:$0xff] %v441
          %590 = vst [vmem:[#allocation2 + $0x20] sm:$0xff] %v443
          %591 = vst.msk [vmem:[#allocation2 + $0x28] sm:$0xff] %vm272, %v553
          %592 = vst [vmem:[#allocation2 + $0x30] sm:$0xff] %v447
          %593 = vst [vmem:[#allocation2 + $0x38] sm:$0xff] %v449
          %594 = vst.msk [vmem:[#allocation2 + $0x40] sm:$0xff] %vm272, %v558
          %595 = vst [vmem:[#allocation2 + $0x48] sm:$0xff] %v453
          %596 = vst [vmem:[#allocation2 + $0x50] sm:$0xff] %v455
          %597 = vst.msk [vmem:[#allocation2 + $0x58] sm:$0xff] %vm272, %v563
          %598 = vst [vmem:[#allocation2 + $0x60] sm:$0xff] %v459
          %599 = vst [vmem:[#allocation2 + $0x68] sm:$0xff] %v461
          %600 = vst.msk [vmem:[#allocation2 + $0x70] sm:$0xff] %vm272, %v568
          %601 = vst [vmem:[#allocation2 + $0x78] sm:$0xff] %v465
          %602 = vst [vmem:[#allocation2 + $0x80] sm:$0xff] %v467
          %603 = vst.msk [vmem:[#allocation2 + $0x88] sm:$0xff] %vm272, %v573
          %604 = vst [vmem:[#allocation2 + $0x90] sm:$0xff] %v471
          %605 = vst [vmem:[#allocation2 + $0x98] sm:$0xff] %v473
          %606 = vst.msk [vmem:[#allocation2 + $0xa0] sm:$0xff] %vm272, %v578
          %607 = vst [vmem:[#allocation2 + $0xa8] sm:$0xff] %v477
          %608 = vst [vmem:[#allocation2 + $0xb0] sm:$0xff] %v479
          %609 = vst.msk [vmem:[#allocation2 + $0xb8] sm:$0xff] %vm272, %v583
          loop: start=0, step=1, limit=2
          $region56: #{multi_head_diff_attention.1} parent=52 // loop_pre_header
            _
          $region57: #{multi_head_diff_attention.1} parent=52 // loop_header
            %s611 = sphi 0, %s615
            %p612 = scmp.ge.s32.totalorder %s611, 2
          $region58: #{multi_head_diff_attention.1} parent=52 // loop_header_branch
            %614 = sbr.rel (%p612) target = $region62
          $region59: #{multi_head_diff_attention.1} parent=52 // loop_body
            %s616 = smul.u32 %s611, 32
            %s617 = sshra.s32 %s616, 3
            %s618 = sand.u32 %s616, 7
            %s619 = smul.u32 %s617, 3
            %s620 = smul.addr %s619, 8
            %s621 = scalar_lea.vmem [#allocation2], %s620
            %v622 = vld [vmem:[%s621] sm:$0xff]
            %v623 = vld [vmem:[%s621 + $0x18] sm:$0xff]
            %v624 = vld [vmem:[%s621 + $0x30] sm:$0xff]
            %v625 = vld [vmem:[%s621 + $0x48] sm:$0xff]
            loop: start=0, step=1, limit=2
            $region63: #{multi_head_diff_attention.1} parent=59 // loop_pre_header
              _
            $region64: #{multi_head_diff_attention.1} parent=59 // loop_header
              %s627 = sphi 0, %s631
              %p628 = scmp.ge.s32.totalorder %s627, 2
              %v632 = vphi -inf, %v917
              %v633 = vphi -inf, %v918
              %v634 = vphi -inf, %v919
              %v635 = vphi -inf, %v920
              %v636 = vphi 0.0, %v1001
              %v637 = vphi 0.0, %v1002
              %v638 = vphi 0.0, %v1003
              %v639 = vphi 0.0, %v1004
              %v640 = vphi 0.0, %v1126
              %v641 = vphi 0.0, %v1127
              %v642 = vphi 0.0, %v1128
              %v643 = vphi 0.0, %v1129
              %v644 = vphi -inf, %v933
              %v645 = vphi -inf, %v934
              %v646 = vphi -inf, %v935
              %v647 = vphi -inf, %v936
              %v648 = vphi 0.0, %v1021
              %v649 = vphi 0.0, %v1022
              %v650 = vphi 0.0, %v1023
              %v651 = vphi 0.0, %v1024
              %v652 = vphi 0.0, %v1231
              %v653 = vphi 0.0, %v1232
              %v654 = vphi 0.0, %v1233
              %v655 = vphi 0.0, %v1234
            $region65: #{multi_head_diff_attention.1} parent=59 // loop_header_branch
              %630 = sbr.rel (%p628) target = $region69
            $region66: #{multi_head_diff_attention.1} parent=59 // loop_body
              %s656 = smul.u32 %s627, 32
              %s657 = sshra.s32 %s656, 3
              %s658 = sand.u32 %s656, 7
              %s659 = smul.u32 %s657, 3
              %s660 = smul.addr %s659, 8
              %s661 = scalar_lea.vmem [#allocation2], %s660
              %v662 = vld [vmem:[%s661 + $0x8] sm:$0xff]
              %v663 = vld [vmem:[%s661 + $0x20] sm:$0xff]
              %v664 = vld [vmem:[%s661 + $0x38] sm:$0xff]
              %v665 = vld [vmem:[%s661 + $0x50] sm:$0xff]
              %v666 = vld [vmem:[%s661 + $0x10] sm:$0xff]
              %v667 = vld [vmem:[%s661 + $0x28] sm:$0xff]
              %v668 = vld [vmem:[%s661 + $0x40] sm:$0xff]
              %v669 = vld [vmem:[%s661 + $0x58] sm:$0xff]
              %v671 = vsel %vm272, %v622, 0
              %v674 = vsel %vm272, %v623, 0
              %v677 = vsel %vm272, %v624, 0
              %v680 = vsel %vm272, %v625, 0
              %v683 = vsel %vm272, %v662, 0
              %v686 = vsel %vm272, %v663, 0
              %v689 = vsel %vm272, %v664, 0
              %v692 = vsel %vm272, %v665, 0
              %694 = vmatprep.subr.mxu0 0.0
              %695 = vmatpush1.xpose.msra.mxu0 0.0
              %696 = vmatprep.subr.mxu0 0.0
              %697 = vmatpush1.xpose.msra.mxu0 0.0
              %698 = vmatprep.subr.mxu0 0.0
              %699 = vmatpush1.xpose.msra.mxu0 0.0
              %700 = vmatprep.subr.mxu0 0.0
              %701 = vmatpush1.xpose.msra.mxu0 0.0
              %702 = vmatprep.subr.mxu0 0.0
              %703 = vmatpush1.xpose.msra.mxu0 0.0
              %704 = vmatprep.subr.mxu0 0.0
              %705 = vmatpush1.xpose.msra.mxu0 0.0
              %706 = vmatprep.subr.mxu0 0.0
              %707 = vmatpush1.xpose.msra.mxu0 0.0
              %708 = vmatprep.subr.mxu0 0.0
              %709 = vmatpush1.xpose.msra.mxu0 0.0
              %710 = vmatprep.subr.mxu0 0.0
              %711 = vmatpush1.xpose.msra.mxu0 0.0
              %712 = vmatprep.subr.mxu0 0.0
              %713 = vmatpush1.xpose.msra.mxu0 0.0
              %714 = vmatprep.subr.mxu0 0.0
              %715 = vmatpush1.xpose.msra.mxu0 0.0
              %716 = vmatprep.subr.mxu0 0.0
              %717 = vmatpush1.xpose.msra.mxu0 0.0
              %718 = vmatprep.subr.mxu0 0.0
              %719 = vmatpush1.xpose.msra.mxu0 %v692
              %720 = vmatprep.subr.mxu0 0.0
              %721 = vmatpush1.xpose.msra.mxu0 %v689
              %722 = vmatprep.subr.mxu0 0.0
              %723 = vmatpush1.xpose.msra.mxu0 %v686
              %724 = vmatprep.subr.mxu0 0.0
              %725 = vmatpush1.xpose.msra.mxu0 %v683
              %726 = vmatprep.subr.mxu0 0.0
              %727 = vmatpush2.xpose.msra.mxu0 0.0
              %728 = vmatprep.subr.mxu0 0.0
              %729 = vmatpush2.xpose.msra.mxu0 0.0
              %730 = vmatprep.subr.mxu0 0.0
              %731 = vmatpush2.xpose.msra.mxu0 0.0
              %732 = vmatprep.subr.mxu0 0.0
              %733 = vmatpush2.xpose.msra.mxu0 0.0
              %734 = vmatprep.subr.mxu0 0.0
              %735 = vmatpush2.xpose.msra.mxu0 0.0
              %736 = vmatprep.subr.mxu0 0.0
              %737 = vmatpush2.xpose.msra.mxu0 0.0
              %738 = vmatprep.subr.mxu0 0.0
              %739 = vmatpush2.xpose.msra.mxu0 0.0
              %740 = vmatprep.subr.mxu0 0.0
              %741 = vmatpush2.xpose.msra.mxu0 0.0
              %742 = vmatprep.subr.mxu0 0.0
              %743 = vmatpush2.xpose.msra.mxu0 0.0
              %744 = vmatprep.subr.mxu0 0.0
              %745 = vmatpush2.xpose.msra.mxu0 0.0
              %746 = vmatprep.subr.mxu0 0.0
              %747 = vmatpush2.xpose.msra.mxu0 0.0
              %748 = vmatprep.subr.mxu0 0.0
              %749 = vmatpush2.xpose.msra.mxu0 0.0
              %750 = vmatprep.subr.mxu0 0.0
              %751 = vmatpush2.xpose.msra.mxu0 0.0
              %752 = vmatprep.subr.mxu0 0.0
              %753 = vmatpush2.xpose.msra.mxu0 0.0
              %754 = vmatprep.subr.mxu0 0.0
              %755 = vmatpush2.xpose.msra.mxu0 0.0
              %756 = vmatprep.subr.mxu0 0.0
              %757 = vmatpush2.xpose.msra.mxu0 0.0
              %758 = vmatprep.mubr.f32.mxu0 0.0
              %759 = vmatmul.mubr.f32.gmra.mxu0 %v671
              %v760 = vpop.f32.mrf.mxu0
              %v761 = vadd.f32 0.0, %v760
              %v762 = vpop.f32.mrf.mxu0
              %763 = vmatprep.mubr.f32.mxu0 0.0
              %764 = vmatmul.mubr.f32.gmra.mxu0 %v674
              %v765 = vpop.f32.mrf.mxu0
              %v766 = vadd.f32 0.0, %v765
              %v767 = vpop.f32.mrf.mxu0
              %768 = vmatprep.mubr.f32.mxu0 0.0
              %769 = vmatmul.mubr.f32.gmra.mxu0 %v677
              %v770 = vpop.f32.mrf.mxu0
              %v771 = vadd.f32 0.0, %v770
              %v772 = vpop.f32.mrf.mxu0
              %773 = vmatprep.mubr.f32.mxu0 0.0
              %774 = vmatmul.mubr.f32.gmra.mxu0 %v680
              %v775 = vpop.f32.mrf.mxu0
              %v776 = vadd.f32 0.0, %v775
              %v777 = vpop.f32.mrf.mxu0
              %778 = vdwg.mxu0
              %v779 = vmul.f32 %v761, 0.125
              %v780 = vmul.f32 %v766, 0.125
              %v781 = vmul.f32 %v771, 0.125
              %v782 = vmul.f32 %v776, 0.125
              %783 = vrot.lane.b32.xlu0 %v622, 64
              %v784 = vpop.permute.xlu0 %783
              %785 = vrot.lane.b32.xlu0 %v623, 64
              %v786 = vpop.permute.xlu0 %785
              %787 = vrot.lane.b32.xlu0 %v624, 64
              %v788 = vpop.permute.xlu0 %787
              %789 = vrot.lane.b32.xlu0 %v625, 64
              %v790 = vpop.permute.xlu0 %789
              %791 = vrot.lane.b32.xlu0 %v662, 64
              %v792 = vpop.permute.xlu0 %791
              %793 = vrot.lane.b32.xlu0 %v663, 64
              %v794 = vpop.permute.xlu0 %793
              %795 = vrot.lane.b32.xlu0 %v664, 64
              %v796 = vpop.permute.xlu0 %795
              %797 = vrot.lane.b32.xlu0 %v665, 64
              %v798 = vpop.permute.xlu0 %797
              %v799 = vsel %vm272, %v784, 0
              %v801 = vsel %vm272, %v786, 0
              %v803 = vsel %vm272, %v788, 0
              %v805 = vsel %vm272, %v790, 0
              %v807 = vsel %vm272, %v792, 0
              %v809 = vsel %vm272, %v794, 0
              %v811 = vsel %vm272, %v796, 0
              %v813 = vsel %vm272, %v798, 0
              %815 = vmatprep.subr.mxu0 0.0
              %816 = vmatpush1.xpose.msra.mxu0 0.0
              %817 = vmatprep.subr.mxu0 0.0
              %818 = vmatpush1.xpose.msra.mxu0 0.0
              %819 = vmatprep.subr.mxu0 0.0
              %820 = vmatpush1.xpose.msra.mxu0 0.0
              %821 = vmatprep.subr.mxu0 0.0
              %822 = vmatpush1.xpose.msra.mxu0 0.0
              %823 = vmatprep.subr.mxu0 0.0
              %824 = vmatpush1.xpose.msra.mxu0 0.0
              %825 = vmatprep.subr.mxu0 0.0
              %826 = vmatpush1.xpose.msra.mxu0 0.0
              %827 = vmatprep.subr.mxu0 0.0
              %828 = vmatpush1.xpose.msra.mxu0 0.0
              %829 = vmatprep.subr.mxu0 0.0
              %830 = vmatpush1.xpose.msra.mxu0 0.0
              %831 = vmatprep.subr.mxu0 0.0
              %832 = vmatpush1.xpose.msra.mxu0 0.0
              %833 = vmatprep.subr.mxu0 0.0
              %834 = vmatpush1.xpose.msra.mxu0 0.0
              %835 = vmatprep.subr.mxu0 0.0
              %836 = vmatpush1.xpose.msra.mxu0 0.0
              %837 = vmatprep.subr.mxu0 0.0
              %838 = vmatpush1.xpose.msra.mxu0 0.0
              %839 = vmatprep.subr.mxu0 0.0
              %840 = vmatpush1.xpose.msra.mxu0 %v813
              %841 = vmatprep.subr.mxu0 0.0
              %842 = vmatpush1.xpose.msra.mxu0 %v811
              %843 = vmatprep.subr.mxu0 0.0
              %844 = vmatpush1.xpose.msra.mxu0 %v809
              %845 = vmatprep.subr.mxu0 0.0
              %846 = vmatpush1.xpose.msra.mxu0 %v807
              %847 = vmatprep.subr.mxu0 0.0
              %848 = vmatpush2.xpose.msra.mxu0 0.0
              %849 = vmatprep.subr.mxu0 0.0
              %850 = vmatpush2.xpose.msra.mxu0 0.0
              %851 = vmatprep.subr.mxu0 0.0
              %852 = vmatpush2.xpose.msra.mxu0 0.0
              %853 = vmatprep.subr.mxu0 0.0
              %854 = vmatpush2.xpose.msra.mxu0 0.0
              %855 = vmatprep.subr.mxu0 0.0
              %856 = vmatpush2.xpose.msra.mxu0 0.0
              %857 = vmatprep.subr.mxu0 0.0
              %858 = vmatpush2.xpose.msra.mxu0 0.0
              %859 = vmatprep.subr.mxu0 0.0
              %860 = vmatpush2.xpose.msra.mxu0 0.0
              %861 = vmatprep.subr.mxu0 0.0
              %862 = vmatpush2.xpose.msra.mxu0 0.0
              %863 = vmatprep.subr.mxu0 0.0
              %864 = vmatpush2.xpose.msra.mxu0 0.0
              %865 = vmatprep.subr.mxu0 0.0
              %866 = vmatpush2.xpose.msra.mxu0 0.0
              %867 = vmatprep.subr.mxu0 0.0
              %868 = vmatpush2.xpose.msra.mxu0 0.0
              %869 = vmatprep.subr.mxu0 0.0
              %870 = vmatpush2.xpose.msra.mxu0 0.0
              %871 = vmatprep.subr.mxu0 0.0
              %872 = vmatpush2.xpose.msra.mxu0 0.0
              %873 = vmatprep.subr.mxu0 0.0
              %874 = vmatpush2.xpose.msra.mxu0 0.0
              %875 = vmatprep.subr.mxu0 0.0
              %876 = vmatpush2.xpose.msra.mxu0 0.0
              %877 = vmatprep.subr.mxu0 0.0
              %878 = vmatpush2.xpose.msra.mxu0 0.0
              %879 = vmatprep.mubr.f32.mxu0 0.0
              %880 = vmatmul.mubr.f32.gmra.mxu0 %v799
              %v881 = vpop.f32.mrf.mxu0
              %v882 = vadd.f32 0.0, %v881
              %v883 = vpop.f32.mrf.mxu0
              %884 = vmatprep.mubr.f32.mxu0 0.0
              %885 = vmatmul.mubr.f32.gmra.mxu0 %v801
              %v886 = vpop.f32.mrf.mxu0
              %v887 = vadd.f32 0.0, %v886
              %v888 = vpop.f32.mrf.mxu0
              %889 = vmatprep.mubr.f32.mxu0 0.0
              %890 = vmatmul.mubr.f32.gmra.mxu0 %v803
              %v891 = vpop.f32.mrf.mxu0
              %v892 = vadd.f32 0.0, %v891
              %v893 = vpop.f32.mrf.mxu0
              %894 = vmatprep.mubr.f32.mxu0 0.0
              %895 = vmatmul.mubr.f32.gmra.mxu0 %v805
              %v896 = vpop.f32.mrf.mxu0
              %v897 = vadd.f32 0.0, %v896
              %v898 = vpop.f32.mrf.mxu0
              %899 = vdwg.mxu0
              %v900 = vmul.f32 %v882, 0.125
              %v901 = vmul.f32 %v887, 0.125
              %v902 = vmul.f32 %v892, 0.125
              %v903 = vmul.f32 %v897, 0.125
              %vm904 = vcmask 261120
              %v905 = vsel %vm904, %v779, -inf
              %906 = vmax.xlane.f32.xlu0 %v905
              %v907 = vpop.xlane.xlu0 %906
              %v908 = vsel %vm904, %v780, -inf
              %909 = vmax.xlane.f32.xlu0 %v908
              %v910 = vpop.xlane.xlu0 %909
              %v911 = vsel %vm904, %v781, -inf
              %912 = vmax.xlane.f32.xlu0 %v911
              %v913 = vpop.xlane.xlu0 %912
              %v914 = vsel %vm904, %v782, -inf
              %915 = vmax.xlane.f32.xlu0 %v914
              %v916 = vpop.xlane.xlu0 %915
              %v917 = vmax.f32 %v632, %v907
              %v918 = vmax.f32 %v633, %v910
              %v919 = vmax.f32 %v634, %v913
              %v920 = vmax.f32 %v635, %v916
              %v921 = vsel %vm904, %v900, -inf
              %922 = vmax.xlane.f32.xlu0 %v921
              %v923 = vpop.xlane.xlu0 %922
              %v924 = vsel %vm904, %v901, -inf
              %925 = vmax.xlane.f32.xlu0 %v924
              %v926 = vpop.xlane.xlu0 %925
              %v927 = vsel %vm904, %v902, -inf
              %928 = vmax.xlane.f32.xlu0 %v927
              %v929 = vpop.xlane.xlu0 %928
              %v930 = vsel %vm904, %v903, -inf
              %931 = vmax.xlane.f32.xlu0 %v930
              %v932 = vpop.xlane.xlu0 %931
              %v933 = vmax.f32 %v644, %v923
              %v934 = vmax.f32 %v645, %v926
              %v935 = vmax.f32 %v646, %v929
              %v936 = vmax.f32 %v647, %v932
              %v937 = vsub.f32 %v779, %v917
              %v938 = vsub.f32 %v780, %v918
              %v939 = vsub.f32 %v781, %v919
              %v940 = vsub.f32 %v782, %v920
              %v941 = vmul.f32 %v937, 1.442695
              %v942 = vpow.pop %v941
              %v943 = vmul.f32 %v938, 1.442695
              %v944 = vpow.pop %v943
              %v945 = vmul.f32 %v939, 1.442695
              %v946 = vpow.pop %v945
              %v947 = vmul.f32 %v940, 1.442695
              %v948 = vpow.pop %v947
              %v949 = vsub.f32 %v900, %v933
              %v950 = vsub.f32 %v901, %v934
              %v951 = vsub.f32 %v902, %v935
              %v952 = vsub.f32 %v903, %v936
              %v953 = vmul.f32 %v949, 1.442695
              %v954 = vpow.pop %v953
              %v955 = vmul.f32 %v950, 1.442695
              %v956 = vpow.pop %v955
              %v957 = vmul.f32 %v951, 1.442695
              %v958 = vpow.pop %v957
              %v959 = vmul.f32 %v952, 1.442695
              %v960 = vpow.pop %v959
              %v961 = vsub.f32 %v632, %v917
              %v962 = vsub.f32 %v633, %v918
              %v963 = vsub.f32 %v634, %v919
              %v964 = vsub.f32 %v635, %v920
              %v965 = vmul.f32 %v961, 1.442695
              %v966 = vpow.pop %v965
              %v967 = vmul.f32 %v962, 1.442695
              %v968 = vpow.pop %v967
              %v969 = vmul.f32 %v963, 1.442695
              %v970 = vpow.pop %v969
              %v971 = vmul.f32 %v964, 1.442695
              %v972 = vpow.pop %v971
              %v973 = vsub.f32 %v644, %v933
              %v974 = vsub.f32 %v645, %v934
              %v975 = vsub.f32 %v646, %v935
              %v976 = vsub.f32 %v647, %v936
              %v977 = vmul.f32 %v973, 1.442695
              %v978 = vpow.pop %v977
              %v979 = vmul.f32 %v974, 1.442695
              %v980 = vpow.pop %v979
              %v981 = vmul.f32 %v975, 1.442695
              %v982 = vpow.pop %v981
              %v983 = vmul.f32 %v976, 1.442695
              %v984 = vpow.pop %v983
              %v985 = vmul.f32 %v966, %v636
              %v986 = vmul.f32 %v968, %v637
              %v987 = vmul.f32 %v970, %v638
              %v988 = vmul.f32 %v972, %v639
              %v989 = vsel %vm904, %v942, 0.0
              %990 = vadd.xlane.f32.xlu0 %v989
              %v991 = vpop.xlane.xlu0 %990
              %v992 = vsel %vm904, %v944, 0.0
              %993 = vadd.xlane.f32.xlu0 %v992
              %v994 = vpop.xlane.xlu0 %993
              %v995 = vsel %vm904, %v946, 0.0
              %996 = vadd.xlane.f32.xlu0 %v995
              %v997 = vpop.xlane.xlu0 %996
              %v998 = vsel %vm904, %v948, 0.0
              %999 = vadd.xlane.f32.xlu0 %v998
              %v1000 = vpop.xlane.xlu0 %999
              %v1001 = vadd.f32 %v985, %v991
              %v1002 = vadd.f32 %v986, %v994
              %v1003 = vadd.f32 %v987, %v997
              %v1004 = vadd.f32 %v988, %v1000
              %v1005 = vmul.f32 %v978, %v648
              %v1006 = vmul.f32 %v980, %v649
              %v1007 = vmul.f32 %v982, %v650
              %v1008 = vmul.f32 %v984, %v651
              %v1009 = vsel %vm904, %v954, 0.0
              %1010 = vadd.xlane.f32.xlu0 %v1009
              %v1011 = vpop.xlane.xlu0 %1010
              %v1012 = vsel %vm904, %v956, 0.0
              %1013 = vadd.xlane.f32.xlu0 %v1012
              %v1014 = vpop.xlane.xlu0 %1013
              %v1015 = vsel %vm904, %v958, 0.0
              %1016 = vadd.xlane.f32.xlu0 %v1015
              %v1017 = vpop.xlane.xlu0 %1016
              %v1018 = vsel %vm904, %v960, 0.0
              %1019 = vadd.xlane.f32.xlu0 %v1018
              %v1020 = vpop.xlane.xlu0 %1019
              %v1021 = vadd.f32 %v1005, %v1011
              %v1022 = vadd.f32 %v1006, %v1014
              %v1023 = vadd.f32 %v1007, %v1017
              %v1024 = vadd.f32 %v1008, %v1020
              %v1025 = vmul.f32 %v966, %v640
              %v1026 = vmul.f32 %v968, %v641
              %v1027 = vmul.f32 %v970, %v642
              %v1028 = vmul.f32 %v972, %v643
              %v1030 = vsel %vm904, %v942, 0
              %v1033 = vsel %vm904, %v944, 0
              %v1036 = vsel %vm904, %v946, 0
              %v1039 = vsel %vm904, %v948, 0
              %1041 = vmatprep.subr.mxu0 0.0
              %1042 = vmatpush1.msra.mxu0 0.0
              %1043 = vmatprep.subr.mxu0 0.0
              %1044 = vmatpush1.msra.mxu0 0.0
              %1045 = vmatprep.subr.mxu0 0.0
              %1046 = vmatpush1.msra.mxu0 0.0
              %1047 = vmatprep.subr.mxu0 0.0
              %1048 = vmatpush1.msra.mxu0 0.0
              %1049 = vmatprep.subr.mxu0 0.0
              %1050 = vmatpush1.msra.mxu0 0.0
              %1051 = vmatprep.subr.mxu0 0.0
              %1052 = vmatpush1.msra.mxu0 0.0
              %1053 = vmatprep.subr.mxu0 0.0
              %1054 = vmatpush1.msra.mxu0 0.0
              %1055 = vmatprep.subr.mxu0 0.0
              %1056 = vmatpush1.msra.mxu0 0.0
              %1057 = vmatprep.subr.mxu0 0.0
              %1058 = vmatpush1.msra.mxu0 0.0
              %1059 = vmatprep.subr.mxu0 0.0
              %1060 = vmatpush1.msra.mxu0 0.0
              %1061 = vmatprep.subr.mxu0 0.0
              %1062 = vmatpush1.msra.mxu0 0.0
              %1063 = vmatprep.subr.mxu0 0.0
              %1064 = vmatpush1.msra.mxu0 0.0
              %1065 = vmatprep.subr.mxu0 0.0
              %1066 = vmatpush1.msra.mxu0 %v669
              %1067 = vmatprep.subr.mxu0 0.0
              %1068 = vmatpush1.msra.mxu0 %v668
              %1069 = vmatprep.subr.mxu0 0.0
              %1070 = vmatpush1.msra.mxu0 %v667
              %1071 = vmatprep.subr.mxu0 0.0
              %1072 = vmatpush1.msra.mxu0 %v666
              %1073 = vmatprep.subr.mxu0 0.0
              %1074 = vmatpush2.msra.mxu0 0.0
              %1075 = vmatprep.subr.mxu0 0.0
              %1076 = vmatpush2.msra.mxu0 0.0
              %1077 = vmatprep.subr.mxu0 0.0
              %1078 = vmatpush2.msra.mxu0 0.0
              %1079 = vmatprep.subr.mxu0 0.0
              %1080 = vmatpush2.msra.mxu0 0.0
              %1081 = vmatprep.subr.mxu0 0.0
              %1082 = vmatpush2.msra.mxu0 0.0
              %1083 = vmatprep.subr.mxu0 0.0
              %1084 = vmatpush2.msra.mxu0 0.0
              %1085 = vmatprep.subr.mxu0 0.0
              %1086 = vmatpush2.msra.mxu0 0.0
              %1087 = vmatprep.subr.mxu0 0.0
              %1088 = vmatpush2.msra.mxu0 0.0
              %1089 = vmatprep.subr.mxu0 0.0
              %1090 = vmatpush2.msra.mxu0 0.0
              %1091 = vmatprep.subr.mxu0 0.0
              %1092 = vmatpush2.msra.mxu0 0.0
              %1093 = vmatprep.subr.mxu0 0.0
              %1094 = vmatpush2.msra.mxu0 0.0
              %1095 = vmatprep.subr.mxu0 0.0
              %1096 = vmatpush2.msra.mxu0 0.0
              %1097 = vmatprep.subr.mxu0 0.0
              %1098 = vmatpush2.msra.mxu0 0.0
              %1099 = vmatprep.subr.mxu0 0.0
              %1100 = vmatpush2.msra.mxu0 0.0
              %1101 = vmatprep.subr.mxu0 0.0
              %1102 = vmatpush2.msra.mxu0 0.0
              %1103 = vmatprep.subr.mxu0 0.0
              %1104 = vmatpush2.msra.mxu0 0.0
              %1105 = vmatprep.mubr.f32.mxu0 0.0
              %1106 = vmatmul.mubr.f32.gmra.mxu0 %v1030
              %v1107 = vpop.f32.mrf.mxu0
              %v1108 = vadd.f32 0.0, %v1107
              %v1109 = vpop.f32.mrf.mxu0
              %1110 = vmatprep.mubr.f32.mxu0 0.0
              %1111 = vmatmul.mubr.f32.gmra.mxu0 %v1033
              %v1112 = vpop.f32.mrf.mxu0
              %v1113 = vadd.f32 0.0, %v1112
              %v1114 = vpop.f32.mrf.mxu0
              %1115 = vmatprep.mubr.f32.mxu0 0.0
              %1116 = vmatmul.mubr.f32.gmra.mxu0 %v1036
              %v1117 = vpop.f32.mrf.mxu0
              %v1118 = vadd.f32 0.0, %v1117
              %v1119 = vpop.f32.mrf.mxu0
              %1120 = vmatprep.mubr.f32.mxu0 0.0
              %1121 = vmatmul.mubr.f32.gmra.mxu0 %v1039
              %v1122 = vpop.f32.mrf.mxu0
              %v1123 = vadd.f32 0.0, %v1122
              %v1124 = vpop.f32.mrf.mxu0
              %1125 = vdwg.mxu0
              %v1126 = vadd.f32 %v1025, %v1108
              %v1127 = vadd.f32 %v1026, %v1113
              %v1128 = vadd.f32 %v1027, %v1118
              %v1129 = vadd.f32 %v1028, %v1123
              %v1130 = vmul.f32 %v978, %v652
              %v1131 = vmul.f32 %v980, %v653
              %v1132 = vmul.f32 %v982, %v654
              %v1133 = vmul.f32 %v984, %v655
              %v1135 = vsel %vm904, %v954, 0
              %v1138 = vsel %vm904, %v956, 0
              %v1141 = vsel %vm904, %v958, 0
              %v1144 = vsel %vm904, %v960, 0
              %1146 = vmatprep.subr.mxu0 0.0
              %1147 = vmatpush1.msra.mxu0 0.0
              %1148 = vmatprep.subr.mxu0 0.0
              %1149 = vmatpush1.msra.mxu0 0.0
              %1150 = vmatprep.subr.mxu0 0.0
              %1151 = vmatpush1.msra.mxu0 0.0
              %1152 = vmatprep.subr.mxu0 0.0
              %1153 = vmatpush1.msra.mxu0 0.0
              %1154 = vmatprep.subr.mxu0 0.0
              %1155 = vmatpush1.msra.mxu0 0.0
              %1156 = vmatprep.subr.mxu0 0.0
              %1157 = vmatpush1.msra.mxu0 0.0
              %1158 = vmatprep.subr.mxu0 0.0
              %1159 = vmatpush1.msra.mxu0 0.0
              %1160 = vmatprep.subr.mxu0 0.0
              %1161 = vmatpush1.msra.mxu0 0.0
              %1162 = vmatprep.subr.mxu0 0.0
              %1163 = vmatpush1.msra.mxu0 0.0
              %1164 = vmatprep.subr.mxu0 0.0
              %1165 = vmatpush1.msra.mxu0 0.0
              %1166 = vmatprep.subr.mxu0 0.0
              %1167 = vmatpush1.msra.mxu0 0.0
              %1168 = vmatprep.subr.mxu0 0.0
              %1169 = vmatpush1.msra.mxu0 0.0
              %1170 = vmatprep.subr.mxu0 0.0
              %1171 = vmatpush1.msra.mxu0 %v669
              %1172 = vmatprep.subr.mxu0 0.0
              %1173 = vmatpush1.msra.mxu0 %v668
              %1174 = vmatprep.subr.mxu0 0.0
              %1175 = vmatpush1.msra.mxu0 %v667
              %1176 = vmatprep.subr.mxu0 0.0
              %1177 = vmatpush1.msra.mxu0 %v666
              %1178 = vmatprep.subr.mxu0 0.0
              %1179 = vmatpush2.msra.mxu0 0.0
              %1180 = vmatprep.subr.mxu0 0.0
              %1181 = vmatpush2.msra.mxu0 0.0
              %1182 = vmatprep.subr.mxu0 0.0
              %1183 = vmatpush2.msra.mxu0 0.0
              %1184 = vmatprep.subr.mxu0 0.0
              %1185 = vmatpush2.msra.mxu0 0.0
              %1186 = vmatprep.subr.mxu0 0.0
              %1187 = vmatpush2.msra.mxu0 0.0
              %1188 = vmatprep.subr.mxu0 0.0
              %1189 = vmatpush2.msra.mxu0 0.0
              %1190 = vmatprep.subr.mxu0 0.0
              %1191 = vmatpush2.msra.mxu0 0.0
              %1192 = vmatprep.subr.mxu0 0.0
              %1193 = vmatpush2.msra.mxu0 0.0
              %1194 = vmatprep.subr.mxu0 0.0
              %1195 = vmatpush2.msra.mxu0 0.0
              %1196 = vmatprep.subr.mxu0 0.0
              %1197 = vmatpush2.msra.mxu0 0.0
              %1198 = vmatprep.subr.mxu0 0.0
              %1199 = vmatpush2.msra.mxu0 0.0
              %1200 = vmatprep.subr.mxu0 0.0
              %1201 = vmatpush2.msra.mxu0 0.0
              %1202 = vmatprep.subr.mxu0 0.0
              %1203 = vmatpush2.msra.mxu0 0.0
              %1204 = vmatprep.subr.mxu0 0.0
              %1205 = vmatpush2.msra.mxu0 0.0
              %1206 = vmatprep.subr.mxu0 0.0
              %1207 = vmatpush2.msra.mxu0 0.0
              %1208 = vmatprep.subr.mxu0 0.0
              %1209 = vmatpush2.msra.mxu0 0.0
              %1210 = vmatprep.mubr.f32.mxu0 0.0
              %1211 = vmatmul.mubr.f32.gmra.mxu0 %v1135
              %v1212 = vpop.f32.mrf.mxu0
              %v1213 = vadd.f32 0.0, %v1212
              %v1214 = vpop.f32.mrf.mxu0
              %1215 = vmatprep.mubr.f32.mxu0 0.0
              %1216 = vmatmul.mubr.f32.gmra.mxu0 %v1138
              %v1217 = vpop.f32.mrf.mxu0
              %v1218 = vadd.f32 0.0, %v1217
              %v1219 = vpop.f32.mrf.mxu0
              %1220 = vmatprep.mubr.f32.mxu0 0.0
              %1221 = vmatmul.mubr.f32.gmra.mxu0 %v1141
              %v1222 = vpop.f32.mrf.mxu0
              %v1223 = vadd.f32 0.0, %v1222
              %v1224 = vpop.f32.mrf.mxu0
              %1225 = vmatprep.mubr.f32.mxu0 0.0
              %1226 = vmatmul.mubr.f32.gmra.mxu0 %v1144
              %v1227 = vpop.f32.mrf.mxu0
              %v1228 = vadd.f32 0.0, %v1227
              %v1229 = vpop.f32.mrf.mxu0
              %1230 = vdwg.mxu0
              %v1231 = vadd.f32 %v1130, %v1213
              %v1232 = vadd.f32 %v1131, %v1218
              %v1233 = vadd.f32 %v1132, %v1223
              %v1234 = vadd.f32 %v1133, %v1228
            $region67: #{multi_head_diff_attention.1} parent=59 // loop_footer
              %s631 = sadd.s32 1, %s627
            $region68: #{multi_head_diff_attention.1} parent=59 // loop_footer_branch
              %626 = sbr.rel target = $region64
            $region69: #{multi_head_diff_attention.1} parent=59 // loop_exit
              _
            %v1235 = vrcp.pop %v636
            %v1236 = vrcp.pop %v637
            %v1237 = vrcp.pop %v638
            %v1238 = vrcp.pop %v639
            %v1239 = vrcp.pop %v648
            %v1240 = vrcp.pop %v649
            %v1241 = vrcp.pop %v650
            %v1242 = vrcp.pop %v651
            %v1243 = vstv %s287
            %v1244 = vmul.f32 %v1243, %v1239
            %v1245 = vmul.f32 %v1243, %v1240
            %v1246 = vmul.f32 %v1243, %v1241
            %v1247 = vmul.f32 %v1243, %v1242
            %v1248 = vmul.f32 %v640, %v1235
            %v1249 = vmul.f32 %v641, %v1236
            %v1250 = vmul.f32 %v642, %v1237
            %v1251 = vmul.f32 %v643, %v1238
            %v1252 = vmul.f32 %v652, %v1244
            %v1253 = vmul.f32 %v653, %v1245
            %v1254 = vmul.f32 %v654, %v1246
            %v1255 = vmul.f32 %v655, %v1247
            %v1256 = vsub.f32 %v1248, %v1252
            %v1257 = vsub.f32 %v1249, %v1253
            %v1258 = vsub.f32 %v1250, %v1254
            %v1259 = vsub.f32 %v1251, %v1255
            %v1261 = vsel %vm272, %v1256, 0
            %v1264 = vsel %vm272, %v1257, 0
            %v1267 = vsel %vm272, %v1258, 0
            %v1270 = vsel %vm272, %v1259, 0
            %1272 = vmatprep.subr.mxu0 0.0
            %1273 = vmatpush1.msra.mxu0 0.0
            %1274 = vmatprep.subr.mxu0 0.0
            %1275 = vmatpush1.msra.mxu0 0.0
            %1276 = vmatprep.subr.mxu0 0.0
            %1277 = vmatpush1.msra.mxu0 0.0
            %1278 = vmatprep.subr.mxu0 0.0
            %1279 = vmatpush1.msra.mxu0 0.0
            %1280 = vmatprep.subr.mxu0 0.0
            %1281 = vmatpush1.msra.mxu0 0.0
            %1282 = vmatprep.subr.mxu0 0.0
            %1283 = vmatpush1.msra.mxu0 0.0
            %1284 = vmatprep.subr.mxu0 0.0
            %1285 = vmatpush1.msra.mxu0 0.0
            %1286 = vmatprep.subr.mxu0 0.0
            %1287 = vmatpush1.msra.mxu0 0.0
            %1288 = vmatprep.subr.mxu0 0.0
            %1289 = vmatpush1.msra.mxu0 %v324
            %1290 = vmatprep.subr.mxu0 0.0
            %1291 = vmatpush1.msra.mxu0 %v323
            %1292 = vmatprep.subr.mxu0 0.0
            %1293 = vmatpush1.msra.mxu0 %v322
            %1294 = vmatprep.subr.mxu0 0.0
            %1295 = vmatpush1.msra.mxu0 %v321
            %1296 = vmatprep.subr.mxu0 0.0
            %1297 = vmatpush1.msra.mxu0 %v320
            %1298 = vmatprep.subr.mxu0 0.0
            %1299 = vmatpush1.msra.mxu0 %v319
            %1300 = vmatprep.subr.mxu0 0.0
            %1301 = vmatpush1.msra.mxu0 %v318
            %1302 = vmatprep.subr.mxu0 0.0
            %1303 = vmatpush1.msra.mxu0 %v317
            %1304 = vmatprep.subr.mxu0 0.0
            %1305 = vmatpush2.msra.mxu0 0.0
            %1306 = vmatprep.subr.mxu0 0.0
            %1307 = vmatpush2.msra.mxu0 0.0
            %1308 = vmatprep.subr.mxu0 0.0
            %1309 = vmatpush2.msra.mxu0 0.0
            %1310 = vmatprep.subr.mxu0 0.0
            %1311 = vmatpush2.msra.mxu0 0.0
            %1312 = vmatprep.subr.mxu0 0.0
            %1313 = vmatpush2.msra.mxu0 0.0
            %1314 = vmatprep.subr.mxu0 0.0
            %1315 = vmatpush2.msra.mxu0 0.0
            %1316 = vmatprep.subr.mxu0 0.0
            %1317 = vmatpush2.msra.mxu0 0.0
            %1318 = vmatprep.subr.mxu0 0.0
            %1319 = vmatpush2.msra.mxu0 0.0
            %1320 = vmatprep.subr.mxu0 0.0
            %1321 = vmatpush2.msra.mxu0 0.0
            %1322 = vmatprep.subr.mxu0 0.0
            %1323 = vmatpush2.msra.mxu0 0.0
            %1324 = vmatprep.subr.mxu0 0.0
            %1325 = vmatpush2.msra.mxu0 0.0
            %1326 = vmatprep.subr.mxu0 0.0
            %1327 = vmatpush2.msra.mxu0 0.0
            %1328 = vmatprep.subr.mxu0 0.0
            %1329 = vmatpush2.msra.mxu0 0.0
            %1330 = vmatprep.subr.mxu0 0.0
            %1331 = vmatpush2.msra.mxu0 0.0
            %1332 = vmatprep.subr.mxu0 0.0
            %1333 = vmatpush2.msra.mxu0 0.0
            %1334 = vmatprep.subr.mxu0 0.0
            %1335 = vmatpush2.msra.mxu0 0.0
            %1336 = vmatprep.mubr.f32.mxu0 0.0
            %1337 = vmatmul.mubr.f32.gmra.mxu0 %v1261
            %v1338 = vpop.f32.mrf.mxu0
            %v1339 = vadd.f32 0.0, %v1338
            %v1340 = vpop.f32.mrf.mxu0
            %1341 = vmatprep.mubr.f32.mxu0 0.0
            %1342 = vmatmul.mubr.f32.gmra.mxu0 %v1264
            %v1343 = vpop.f32.mrf.mxu0
            %v1344 = vadd.f32 0.0, %v1343
            %v1345 = vpop.f32.mrf.mxu0
            %1346 = vmatprep.mubr.f32.mxu0 0.0
            %1347 = vmatmul.mubr.f32.gmra.mxu0 %v1267
            %v1348 = vpop.f32.mrf.mxu0
            %v1349 = vadd.f32 0.0, %v1348
            %v1350 = vpop.f32.mrf.mxu0
            %1351 = vmatprep.mubr.f32.mxu0 0.0
            %1352 = vmatmul.mubr.f32.gmra.mxu0 %v1270
            %v1353 = vpop.f32.mrf.mxu0
            %v1354 = vadd.f32 0.0, %v1353
            %v1355 = vpop.f32.mrf.mxu0
            %1356 = vdwg.mxu0
            %s1357 = scalar_lea.vmem [#allocation3], %s616
            %v1358 = vld [vmem:[%s1357] sm:$0xff]
            %v1359 = vld [vmem:[%s1357 + $0x8] sm:$0xff]
            %v1360 = vld [vmem:[%s1357 + $0x10] sm:$0xff]
            %v1361 = vld [vmem:[%s1357 + $0x18] sm:$0xff]
            %v1362 = vadd.f32 %v1358, %v1339
            %v1363 = vadd.f32 %v1359, %v1344
            %v1364 = vadd.f32 %v1360, %v1349
            %v1365 = vadd.f32 %v1361, %v1354
            %1366 = vst.msk [vmem:[%s1357] sm:$0xff] %vm272, %v1362
            %1367 = vst.msk [vmem:[%s1357 + $0x8] sm:$0xff] %vm272, %v1363
            %1368 = vst.msk [vmem:[%s1357 + $0x10] sm:$0xff] %vm272, %v1364
            %1369 = vst.msk [vmem:[%s1357 + $0x18] sm:$0xff] %vm272, %v1365
          $region60: #{multi_head_diff_attention.1} parent=52 // loop_footer
            %s615 = sadd.s32 1, %s611
          $region61: #{multi_head_diff_attention.1} parent=52 // loop_footer_branch
            %610 = sbr.rel target = $region57
          $region62: #{multi_head_diff_attention.1} parent=52 // loop_exit
            _
        $region53: #{multi_head_diff_attention.1} parent=43 // loop_footer
          %s286 = sadd.s32 1, %s282
        $region54: #{multi_head_diff_attention.1} parent=43 // loop_footer_branch
          %281 = sbr.rel target = $region50
        $region55: #{multi_head_diff_attention.1} parent=43 // loop_exit
          _
        %v1370 = vld [vmem:[#allocation3] sm:$0xff]
        %v1371 = vld [vmem:[#allocation3 + $0x8] sm:$0xff]
        %v1372 = vld [vmem:[#allocation3 + $0x10] sm:$0xff]
        %v1373 = vld [vmem:[#allocation3 + $0x18] sm:$0xff]
        %v1374 = vld [vmem:[#allocation3 + $0x20] sm:$0xff]
        %v1375 = vld [vmem:[#allocation3 + $0x28] sm:$0xff]
        %v1376 = vld [vmem:[#allocation3 + $0x30] sm:$0xff]
        %v1377 = vld [vmem:[#allocation3 + $0x38] sm:$0xff]
        %v1378 = vld [vmem:[%s5] sm:$0x1]
        %v1380 = vlaneseq
        %v1381 = vshrl.u32 %v1380, 7
        %v1382 = vsub.s32 0, %v1381
        %v1383 = vrot.slane %v1378, %v1382
        %v1385 = vadd.f32 %v1370, %v1383
        %v1386 = vadd.f32 %v1371, %v1383
        %v1387 = vadd.f32 %v1372, %v1383
        %v1388 = vadd.f32 %v1373, %v1383
        %v1389 = vadd.f32 %v1374, %v1383
        %v1390 = vadd.f32 %v1375, %v1383
        %v1391 = vadd.f32 %v1376, %v1383
        %v1392 = vadd.f32 %v1377, %v1383
        %v1393 = vmul.f32 %v1385, 0.2
        %v1394 = vmul.f32 %v1386, 0.2
        %v1395 = vmul.f32 %v1387, 0.2
        %v1396 = vmul.f32 %v1388, 0.2
        %v1397 = vmul.f32 %v1389, 0.2
        %v1398 = vmul.f32 %v1390, 0.2
        %v1399 = vmul.f32 %v1391, 0.2
        %v1400 = vmul.f32 %v1392, 0.2
        %1401 = vst.msk [vmem:[%s258] sm:$0xff] %vm272, %v1393
        %1402 = vst.msk [vmem:[%s258 + $0x8] sm:$0xff] %vm272, %v1394
        %1403 = vst.msk [vmem:[%s258 + $0x10] sm:$0xff] %vm272, %v1395
        %1404 = vst.msk [vmem:[%s258 + $0x18] sm:$0xff] %vm272, %v1396
        %1405 = vst.msk [vmem:[%s258 + $0x20] sm:$0xff] %vm272, %v1397
        %1406 = vst.msk [vmem:[%s258 + $0x28] sm:$0xff] %vm272, %v1398
        %1407 = vst.msk [vmem:[%s258 + $0x30] sm:$0xff] %vm272, %v1399
        %1408 = vst.msk [vmem:[%s258 + $0x38] sm:$0xff] %vm272, %v1400
        %s1409 = sand.u32 %s160, 1
        %s1410 = scalar_lea.sflag [#allocation5], %s1409
        %s1411 = sand.u32 %s160, 1
        %s1412 = smul.addr %s1411, 64
        %s1413 = scalar_lea.vmem [#allocation7], %s1412
        // Predicated region
        $region70: #{multi_head_diff_attention.1} parent=43 // pred_check
          %p1414 = pneg %p170
        $region71: #{multi_head_diff_attention.1} parent=43 // pred_check_branch
          %1416 = sbr.rel (%p1414) target = $region73
        $region72: #{multi_head_diff_attention.1} parent=43 // pred_region
          %s1418 = ssub.s32 1024, 1024
          %1419 = vsyncadd %s1410, %s1418
          %s1420 = smul.addr %s21, 8
          %s1421 = smul.addr %s1420, 128
          %s1422 = scalar_lea.hbm %s6, %s1421
          %s1423 = sshll.u32 %s1413, 4
          %s1424 = int_to_ptr.vmem [resolvable:$true] %s1423
          %1429 = dma.vmem_to_hbm [thread:$0]  %s1424, 1024, %s1422, %s1410, 128, 128, 8
        $region73: #{multi_head_diff_attention.1} parent=43 // pred_fallthru
          _
      $region44: #{multi_head_diff_attention.1} parent=5 // pred_fallthru
        _
      %p1430 = scmp.le.s32.totalorder 2, %s16
      // Predicated region
      $region74: #{multi_head_diff_attention.1} parent=5 // pred_check
        %p1431 = pneg %p1430
      $region75: #{multi_head_diff_attention.1} parent=5 // pred_check_branch
        %1433 = sbr.rel (%p1431) target = $region77
      $region76: #{multi_head_diff_attention.1} parent=5 // pred_region
        %s1434 = ssub.s32 %s16, 2
        // Predicated region
        $region78: #{multi_head_diff_attention.1} parent=76 // pred_check
          %p1435 = pneg %p176
        $region79: #{multi_head_diff_attention.1} parent=76 // pred_check_branch
          %1437 = sbr.rel (%p1435) target = $region81
        $region80: #{multi_head_diff_attention.1} parent=76 // pred_region
          %s1438 = sand.u32 %s161, 1
          %s1439 = scalar_lea.sflag [#allocation5], %s1438
          %s1440 = sand.u32 %s161, 1
          %s1441 = smul.addr %s1440, 64
          %s1442 = scalar_lea.vmem [#allocation7], %s1441
          %1443 = dma.done %s1439, 1024
        $region81: #{multi_head_diff_attention.1} parent=76 // pred_fallthru
          _
      $region77: #{multi_head_diff_attention.1} parent=5 // pred_fallthru
        _
    $region6: #{multi_head_diff_attention.1} parent=1 // loop_footer
      %s20 = sadd.s32 1, %s16
    $region7: #{multi_head_diff_attention.1} parent=1 // loop_footer_branch
      %15 = sbr.rel target = $region3
    $region8: #{multi_head_diff_attention.1} parent=1 // loop_exit
      _
    %1444 = vsyncpa [#allocation5], 1
    %s1445 = scalar_lea.sflag [#allocation5], 1
    %1446 = vsyncpa %s1445, 1
    %1447 = vsyncpa [#allocation6], 1
    %s1448 = scalar_lea.sflag [#allocation6], 1
    %1449 = vsyncpa %s1448, 1

</llo_original>
